<compile_context>
chip_gen: v5e
topology: v5e:2x2
jax: 0.10.0
libtpu: 0.0.40
codegen_flags: <defaults>
</compile_context>

<pallas_src>
import functools
import math

import jax
import jax.numpy as jnp
from jax.experimental import pallas as pl
from jax.experimental.pallas import tpu as pltpu


def _attn_single_kv_kernel(q_ref, k_ref, v_ref, o_ref, *, scale):
    """One (batch, q-block) tile against the full KV sequence (no scratch)."""
    q = q_ref[0] * scale          # (H, tq, D)
    k = k_ref[0]                  # (H, S,  D)
    v = v_ref[0]                  # (H, S,  D)

    # s[h, q, k] = sum_d q[h, q, d] * k[h, k, d]
    s = jax.lax.dot_general(
        q, k,
        dimension_numbers=(((2,), (2,)), ((0,), (0,))),
        preferred_element_type=jnp.float32,
    )                             # (H, tq, S) f32

    m = jnp.max(s, axis=-1, keepdims=True)
    p = jnp.exp(s - m)
    l = jnp.sum(p, axis=-1, keepdims=True)

    pv = jax.lax.dot_general(
        p.astype(v.dtype), v,
        dimension_numbers=(((2,), (1,)), ((0,), (0,))),
        preferred_element_type=jnp.float32,
    )                             # (H, tq, D) f32
    o_ref[0] = (pv * pl.reciprocal(l, approx=True)).astype(o_ref.dtype)


def _flash_attn_kernel(q_ref, k_ref, v_ref, o_ref, m_sc, l_sc, acc_sc, *, scale):
    """One (batch, q-block) tile, iterated over kv-blocks (innermost grid axis)."""
    ki = pl.program_id(2)

    @pl.when(ki == 0)
    def _init():
        m_sc[...] = jnp.full_like(m_sc, -jnp.inf)
        l_sc[...] = jnp.zeros_like(l_sc)
        acc_sc[...] = jnp.zeros_like(acc_sc)

    # Blocks are (1, H, tq|tk, D); drop the leading unit batch dim.
    q = q_ref[0] * scale          # (H, tq, D) -- fold 1/sqrt(D) into q
    k = k_ref[0]                  # (H, tk, D)
    v = v_ref[0]                  # (H, tk, D)

    s = jax.lax.dot_general(
        q, k,
        dimension_numbers=(((2,), (2,)), ((0,), (0,))),
        preferred_element_type=jnp.float32,
    )                             # (H, tq, tk) f32

    # Online softmax update (statistics kept in f32).
    m_prev = m_sc[...]
    m_new = jnp.maximum(m_prev, jnp.max(s, axis=-1, keepdims=True))
    alpha = jnp.exp(m_prev - m_new)                 # rescale factor for old stats
    p = jnp.exp(s - m_new)                          # (H, tq, tk) f32, unnormalized
    l_sc[...] = alpha * l_sc[...] + jnp.sum(p, axis=-1, keepdims=True)

    pv = jax.lax.dot_general(
        p.astype(v.dtype), v,
        dimension_numbers=(((2,), (1,)), ((0,), (0,))),
        preferred_element_type=jnp.float32,
    )                             # (H, tq, D) f32
    acc_sc[...] = alpha * acc_sc[...] + pv
    m_sc[...] = m_new

    @pl.when(ki == pl.num_programs(2) - 1)
    def _finalize():
        inv_l = pl.reciprocal(l_sc[...], approx=True)
        o_ref[0] = (acc_sc[...] * inv_l).astype(o_ref.dtype)


def _pick_block(S, candidates):
    for t in candidates:
        if S % t == 0:
            return t
    return S  # fall back to the full (untiled) sequence length


def attn_pallas(q, k, v, head_dim, *, block_q=None, block_kv=None):
    """Equivalent of Attn(head_dim, use_flash_attention=*)(q, k, v)."""
    B, H, S, D = q.shape
    assert k.shape == (B, H, S, D) and v.shape == (B, H, S, D)
    assert D == head_dim
    scale = 1.0 / math.sqrt(head_dim)

    if block_q is None:
        block_q = _pick_block(S, (256, 128))
    if block_kv is None:
        # Larger KV tiles amortize rescale work + per-step overhead, but keep
        # the f32 (H, tq, tk) score tile under ~4 MiB to avoid spills.
        budget = 4 << 20
        cands = [t for t in (1024, 512, 256, 128) if H * block_q * t * 4 <= budget]
        block_kv = _pick_block(S, cands or (128,))
    assert S % block_q == 0 and S % block_kv == 0
    num_q = S // block_q
    num_kv = S // block_kv

    itemsize = jnp.dtype(q.dtype).itemsize
    cost = pl.CostEstimate(
        flops=4 * B * H * S * S * D,          # QK^T + PV
        transcendentals=B * H * S * S,        # exp
        bytes_accessed=4 * B * H * S * D * itemsize,
    )

    q_spec_args = (1, H, block_q, D)
    out_shape = jax.ShapeDtypeStruct((B, H, S, D), q.dtype)

    if num_kv == 1:
        # Fast path: one KV block -> no online softmax, no scratch.
        kernel = functools.partial(_attn_single_kv_kernel, scale=scale)
        return pl.pallas_call(
            kernel,
            out_shape=out_shape,
            grid_spec=pltpu.PrefetchScalarGridSpec(
                num_scalar_prefetch=0,
                grid=(B, num_q),
                in_specs=[
                    pl.BlockSpec(q_spec_args, lambda b, qi: (b, 0, qi, 0)),
                    pl.BlockSpec((1, H, S, D), lambda b, qi: (b, 0, 0, 0)),
                    pl.BlockSpec((1, H, S, D), lambda b, qi: (b, 0, 0, 0)),
                ],
                out_specs=pl.BlockSpec(q_spec_args, lambda b, qi: (b, 0, qi, 0)),
            ),
            compiler_params=pltpu.CompilerParams(
                dimension_semantics=("parallel", "parallel"),
            ),
            cost_estimate=cost,
        )(q, k, v)

    kernel = functools.partial(_flash_attn_kernel, scale=scale)
    q_spec = pl.BlockSpec(q_spec_args, lambda b, qi, ki: (b, 0, qi, 0))
    kv_spec = pl.BlockSpec((1, H, block_kv, D), lambda b, qi, ki: (b, 0, ki, 0))
    out_spec = pl.BlockSpec(q_spec_args, lambda b, qi, ki: (b, 0, qi, 0))

    return pl.pallas_call(
        kernel,
        out_shape=out_shape,
        grid_spec=pltpu.PrefetchScalarGridSpec(
            num_scalar_prefetch=0,
            grid=(B, num_q, num_kv),
            in_specs=[q_spec, kv_spec, kv_spec],
            out_specs=out_spec,
            scratch_shapes=[
                pltpu.VMEM((H, block_q, 1), jnp.float32),   # running max m
                pltpu.VMEM((H, block_q, 1), jnp.float32),   # running sum l
                pltpu.VMEM((H, block_q, D), jnp.float32),   # unnormalized acc
            ],
        ),
        compiler_params=pltpu.CompilerParams(
            dimension_semantics=("parallel", "parallel", "arbitrary"),
        ),
        cost_estimate=cost,
    )(q, k, v)


def attn_reference(q, k, v, head_dim):
    s = jnp.einsum("bhqd,bhkd->bhqk", q, k) / math.sqrt(head_dim)
    p = jax.nn.softmax(s, axis=-1)
    return jnp.einsum("bhqk,bhkd->bhqd", p, v)


def _check(q, k, v, D, **kw):
    out = jax.block_until_ready(attn_pallas(q, k, v, head_dim=D, **kw))
    ref = attn_reference(q, k, v, head_dim=D)
    assert out.shape == q.shape
    # approx reciprocal in the final normalization -> allow ~1e-3-level error.
    assert jnp.allclose(out, ref, atol=2e-3, rtol=2e-3), (
        f"mismatch vs reference, max abs err {jnp.max(jnp.abs(out - ref))}")


if __name__ == "__main__":
    key = jax.random.PRNGKey(0)
    k1, k2 = jax.random.split(key)

    # Shapes consistent with the module: (batch, heads, seq, head_dim).
    # Case 1: single-KV-block fast path.
    B, H, S, D = 2, 4, 128, 32
    kq, kk, kv = jax.random.split(k1, 3)
    q = jax.random.normal(kq, (B, H, S, D), dtype=jnp.float32)
    k = jax.random.normal(kk, (B, H, S, D), dtype=jnp.float32)
    v = jax.random.normal(kv, (B, H, S, D), dtype=jnp.float32)
    _check(q, k, v, D)

    # Case 2: multiple KV blocks -> exercises the flash (online-softmax) path.
    B2, H2, S2, D2 = 1, 2, 256, 32
    kq2, kk2, kv2 = jax.random.split(k2, 3)
    q2 = jax.random.normal(kq2, (B2, H2, S2, D2), dtype=jnp.float32)
    k2_ = jax.random.normal(kk2, (B2, H2, S2, D2), dtype=jnp.float32)
    v2 = jax.random.normal(kv2, (B2, H2, S2, D2), dtype=jnp.float32)
    _check(q2, k2_, v2, D2, block_q=128, block_kv=128)

    print("KERNEL_OK")
</pallas_src>

<mosaic_0001>
module attributes {stable_mosaic.version = 11 : i64} {
  func.func @_attn_single_kv_kernel(%arg0: i32, %arg1: i32, %arg2: memref<1x4x128x32xf32, #tpu.memory_space<vmem>>, %arg3: memref<1x4x128x32xf32, #tpu.memory_space<vmem>>, %arg4: memref<1x4x128x32xf32, #tpu.memory_space<vmem>>, %arg5: memref<1x4x128x32xf32, #tpu.memory_space<vmem>>) attributes {dimension_semantics = [#tpu.dimension_semantics<parallel>, #tpu.dimension_semantics<parallel>], iteration_bounds = array<i64: 2, 1>, scalar_prefetch = 0 : i64, scratch_operands = 0 : i64, tpu.core_type = #tpu.core_type<tc>, window_params = [{transform_indices = @transform_0, window_bounds = array<i64: 1, 4, 128, 32>}, {transform_indices = @transform_1, window_bounds = array<i64: 1, 4, 128, 32>}, {transform_indices = @transform_2, window_bounds = array<i64: 1, 4, 128, 32>}, {transform_indices = @transform_3, window_bounds = array<i64: 1, 4, 128, 32>}]} {
    %c0 = arith.constant 0 : index
    %c0_0 = arith.constant 0 : index
    %c0_1 = arith.constant 0 : index
    %c0_2 = arith.constant 0 : index
    %0 = vector.load %arg2[%c0, %c0_0, %c0_1, %c0_2] : memref<1x4x128x32xf32, #tpu.memory_space<vmem>>, vector<1x4x128x32xf32>
    %1 = vector.shape_cast %0 : vector<1x4x128x32xf32> to vector<4x128x32xf32>
    %cst = arith.constant 0.176776692 : f32
    %2 = vector.broadcast %cst : f32 to vector<4x128x32xf32>
    %3 = arith.mulf %1, %2 : vector<4x128x32xf32>
    %c0_3 = arith.constant 0 : index
    %c0_4 = arith.constant 0 : index
    %c0_5 = arith.constant 0 : index
    %c0_6 = arith.constant 0 : index
    %4 = vector.load %arg3[%c0_3, %c0_4, %c0_5, %c0_6] : memref<1x4x128x32xf32, #tpu.memory_space<vmem>>, vector<1x4x128x32xf32>
    %5 = vector.shape_cast %4 : vector<1x4x128x32xf32> to vector<4x128x32xf32>
    %c0_7 = arith.constant 0 : index
    %c0_8 = arith.constant 0 : index
    %c0_9 = arith.constant 0 : index
    %c0_10 = arith.constant 0 : index
    %6 = vector.load %arg4[%c0_7, %c0_8, %c0_9, %c0_10] : memref<1x4x128x32xf32, #tpu.memory_space<vmem>>, vector<1x4x128x32xf32>
    %7 = vector.shape_cast %6 : vector<1x4x128x32xf32> to vector<4x128x32xf32>
    %cst_11 = arith.constant dense<0.000000e+00> : vector<4x128x128xf32>
    %8 = tpu.matmul %3, %5, %cst_11 {dimension_numbers = #tpu.dot_dimension_numbers<[2], [2], [1], [1], [0, 0, 0, 1, 1, 1], [0], [0]>} : vector<4x128x32xf32>, vector<4x128x32xf32>, vector<4x128x128xf32> -> vector<4x128x128xf32>
    %cst_12 = arith.constant dense<0xFF800000> : vector<4x128xf32>
    %9 = vector.multi_reduction <maximumf>, %8, %cst_12 [2] : vector<4x128x128xf32> to vector<4x128xf32>
    %10 = vector.shape_cast %9 : vector<4x128xf32> to vector<4x128x1xf32>
    %11 = vector.broadcast %10 : vector<4x128x1xf32> to vector<4x128x128xf32>
    %12 = arith.subf %8, %11 : vector<4x128x128xf32>
    %13 = math.exp %12 : vector<4x128x128xf32>
    %cst_13 = arith.constant dense<0.000000e+00> : vector<4x128xf32>
    %14 = vector.multi_reduction <add>, %13, %cst_13 [2] : vector<4x128x128xf32> to vector<4x128xf32>
    %15 = vector.shape_cast %14 : vector<4x128xf32> to vector<4x128x1xf32>
    %cst_14 = arith.constant dense<0.000000e+00> : vector<4x128x32xf32>
    %16 = tpu.matmul %13, %7, %cst_14 {dimension_numbers = #tpu.dot_dimension_numbers<[2], [1], [1], [2], [0, 0, 0, 1, 1, 2], [0], [0]>} : vector<4x128x128xf32>, vector<4x128x32xf32>, vector<4x128x32xf32> -> vector<4x128x32xf32>
    %17 = tpu.reciprocal %15 {approx = true} : vector<4x128x1xf32> -> vector<4x128x1xf32>
    %18 = vector.broadcast %17 : vector<4x128x1xf32> to vector<4x128x32xf32>
    %19 = arith.mulf %16, %18 : vector<4x128x32xf32>
    %c0_15 = arith.constant 0 : index
    %c0_16 = arith.constant 0 : index
    %c0_17 = arith.constant 0 : index
    %c0_18 = arith.constant 0 : index
    %20 = vector.load %arg5[%c0_15, %c0_16, %c0_17, %c0_18] : memref<1x4x128x32xf32, #tpu.memory_space<vmem>>, vector<1x4x128x32xf32>
    %21 = vector.shape_cast %20 : vector<1x4x128x32xf32> to vector<4x128x32xf32>
    %22 = vector.shape_cast %19 : vector<4x128x32xf32> to vector<1x4x128x32xf32>
    tpu.vector_store %arg5[%c0_15, %c0_16, %c0_17, %c0_18], %22 {strides = array<i32>} : memref<1x4x128x32xf32, #tpu.memory_space<vmem>>, vector<1x4x128x32xf32>,
    return
  }
  func.func @transform_0(%arg0: i32, %arg1: i32) -> (i32, i32, i32, i32) {
    %c0_i32 = arith.constant 0 : i32
    %c0_i32_0 = arith.constant 0 : i32
    %c0_i32_1 = arith.constant 0 : i32
    return %arg0, %c0_i32, %arg1, %c0_i32_0 : i32, i32, i32, i32
  }
  func.func @transform_1(%arg0: i32, %arg1: i32) -> (i32, i32, i32, i32) {
    %c0_i32 = arith.constant 0 : i32
    %c0_i32_0 = arith.constant 0 : i32
    %c0_i32_1 = arith.constant 0 : i32
    %c0_i32_2 = arith.constant 0 : i32
    return %arg0, %c0_i32, %c0_i32_0, %c0_i32_1 : i32, i32, i32, i32
  }
  func.func @transform_2(%arg0: i32, %arg1: i32) -> (i32, i32, i32, i32) {
    %c0_i32 = arith.constant 0 : i32
    %c0_i32_0 = arith.constant 0 : i32
    %c0_i32_1 = arith.constant 0 : i32
    %c0_i32_2 = arith.constant 0 : i32
    return %arg0, %c0_i32, %c0_i32_0, %c0_i32_1 : i32, i32, i32, i32
  }
  func.func @transform_3(%arg0: i32, %arg1: i32) -> (i32, i32, i32, i32) {
    %c0_i32 = arith.constant 0 : i32
    %c0_i32_0 = arith.constant 0 : i32
    %c0_i32_1 = arith.constant 0 : i32
    return %arg0, %c0_i32, %arg1, %c0_i32_0 : i32, i32, i32, i32
  }
}

</mosaic_0001>

<llo_original>
// kernel: tpu_custom_call.1
$region0: #{tpu_custom_call.1}
  #allocation0 [shape = 'u32[]', space=smem, size = 0x4, offset = 0x4, fixed_abs, tag = 'smem constant byte address 0x4 - core index']
  #allocation1 [shape = 'u32[72,128]{1,0:T(1,128)}', space=vmem, size = 0x9000, scoped, tag = 'internal scratch']
  %s0 = inlined_call_operand.vmem [shape: f32[2,4,128,32], index: 0, kind: input, shape index: {}]
  %s1 = inlined_call_operand.vmem [shape: f32[2,4,128,32], index: 1, kind: input, shape index: {}]
  %s2 = inlined_call_operand.vmem [shape: f32[2,4,128,32], index: 2, kind: input, shape index: {}]
  %s3 = inlined_call_operand.vmem [shape: f32[2,4,128,32], index: 3, kind: output, shape index: {}]
  %s4 = sld [smem:[#allocation0]]
  $region45: #{tpu_custom_call.1} parent=0
    _
  %s6 = ssub.s32 1, %s4
  %s7 = scalar_select 0, %s6, %s4
  loop: start=0, step=1, limit=4
  $region2: #{tpu_custom_call.1} parent=0 // loop_pre_header
    _
  $region3: #{tpu_custom_call.1} parent=0 // loop_header
    %s9 = sphi 0, %s13
    %p10 = scmp.ge.s32.totalorder %s9, 4
    %s16 = sphi 0, %s28
    %s17 = sphi 0, %s24
    %s18 = sphi 0, %s16
    %s19 = sphi 0, %s17
    %s20 = sphi 0, %s18
    %s21 = sphi 0, %s19
    %s33 = sphi 0, %s35
    %s36 = sphi 0, %s33
    %s37 = sphi 0, %s36
    %s53 = sphi 0, %s37
    %s59 = sphi 0, %s61
    %s62 = sphi 0, %s59
    %s63 = sphi 0, %s62
    %s79 = sphi 0, %s63
    %s85 = sphi 0, %s87
    %s88 = sphi 0, %s85
    %s89 = sphi 0, %s88
    %s105 = sphi 0, %s89
    %s113 = sphi 0, %s115
    %s116 = sphi 0, %s113
    %s117 = sphi 0, %s116
    %s133 = sphi 0, %s117
  $region4: #{tpu_custom_call.1} parent=0 // loop_header_branch
    %12 = sbr.rel (%p10) target = $region8
  $region5: #{tpu_custom_call.1} parent=0 // loop_body
    %s14 = ssub.s32 %s9, 1
    %s15 = ssub.s32 %s9, 2
    %s22 = sadd.s32 1, %s17
    %p23 = scmp.ge.s32.totalorder %s22, 1
    %s24 = scalar_select %p23, 0, %s22
    %s25 = sadd.s32 1, %s16
    %s26 = scalar_select %p23, %s25, %s16
    %p27 = scmp.ge.s32.totalorder %s26, 2
    %s28 = scalar_select %p27, 0, %s26
    %s29 = ssub.s32 %s16, %s28
    %s30 = ssub.s32 %s17, %s24
    %s31 = sor.u32 %s29, %s30
    %p32 = scmp.eq.s32.totalorder %s31, 0
    %s34 = sadd.s32 %s33, 1
    %s35 = scalar_select %p32, %s33, %s34
    %p38 = pneg %p32
    %p39 = scmp.eq.s32.totalorder %s9, 1
    %p40 = por %p38, %p39
    %p41 = scmp.ne.s32.totalorder %s33, %s36
    %p42 = scmp.eq.s32.totalorder %s9, 0
    %p43 = por %p41, %p42
    %p44 = scmp.ne.s32.totalorder %s33, %s36
    %p45 = scmp.eq.s32.totalorder %s14, 1
    %p46 = por %p44, %p45
    %p47 = scmp.ne.s32.totalorder %s36, %s37
    %p48 = scmp.eq.s32.totalorder %s14, 0
    %p49 = por %p47, %p48
    %p50 = scmp.ne.s32.totalorder %s36, %s37
    %p51 = scmp.eq.s32.totalorder %s15, 1
    %p52 = por %p50, %p51
    %p54 = scmp.ne.s32.totalorder %s37, %s53
    %p55 = scmp.eq.s32.totalorder %s15, 0
    %p56 = por %p54, %p55
    %s57 = ssub.s32 %s16, %s28
    %p58 = scmp.eq.s32.totalorder %s57, 0
    %s60 = sadd.s32 %s59, 1
    %s61 = scalar_select %p58, %s59, %s60
    %p64 = pneg %p58
    %p65 = scmp.eq.s32.totalorder %s9, 1
    %p66 = por %p64, %p65
    %p67 = scmp.ne.s32.totalorder %s59, %s62
    %p68 = scmp.eq.s32.totalorder %s9, 0
    %p69 = por %p67, %p68
    %p70 = scmp.ne.s32.totalorder %s59, %s62
    %p71 = scmp.eq.s32.totalorder %s14, 1
    %p72 = por %p70, %p71
    %p73 = scmp.ne.s32.totalorder %s62, %s63
    %p74 = scmp.eq.s32.totalorder %s14, 0
    %p75 = por %p73, %p74
    %p76 = scmp.ne.s32.totalorder %s62, %s63
    %p77 = scmp.eq.s32.totalorder %s15, 1
    %p78 = por %p76, %p77
    %p80 = scmp.ne.s32.totalorder %s63, %s79
    %p81 = scmp.eq.s32.totalorder %s15, 0
    %p82 = por %p80, %p81
    %s83 = ssub.s32 %s16, %s28
    %p84 = scmp.eq.s32.totalorder %s83, 0
    %s86 = sadd.s32 %s85, 1
    %s87 = scalar_select %p84, %s85, %s86
    %p90 = pneg %p84
    %p91 = scmp.eq.s32.totalorder %s9, 1
    %p92 = por %p90, %p91
    %p93 = scmp.ne.s32.totalorder %s85, %s88
    %p94 = scmp.eq.s32.totalorder %s9, 0
    %p95 = por %p93, %p94
    %p96 = scmp.ne.s32.totalorder %s85, %s88
    %p97 = scmp.eq.s32.totalorder %s14, 1
    %p98 = por %p96, %p97
    %p99 = scmp.ne.s32.totalorder %s88, %s89
    %p100 = scmp.eq.s32.totalorder %s14, 0
    %p101 = por %p99, %p100
    %p102 = scmp.ne.s32.totalorder %s88, %s89
    %p103 = scmp.eq.s32.totalorder %s15, 1
    %p104 = por %p102, %p103
    %p106 = scmp.ne.s32.totalorder %s89, %s105
    %p107 = scmp.eq.s32.totalorder %s15, 0
    %p108 = por %p106, %p107
    %s109 = ssub.s32 %s16, %s28
    %s110 = ssub.s32 %s17, %s24
    %s111 = sor.u32 %s109, %s110
    %p112 = scmp.eq.s32.totalorder %s111, 0
    %s114 = sadd.s32 %s113, 1
    %s115 = scalar_select %p112, %s113, %s114
    %p118 = pneg %p112
    %p119 = scmp.eq.s32.totalorder %s9, 1
    %p120 = por %p118, %p119
    %p121 = scmp.ne.s32.totalorder %s113, %s116
    %p122 = scmp.eq.s32.totalorder %s9, 0
    %p123 = por %p121, %p122
    %p124 = scmp.ne.s32.totalorder %s113, %s116
    %p125 = scmp.eq.s32.totalorder %s14, 1
    %p126 = por %p124, %p125
    %p127 = scmp.ne.s32.totalorder %s116, %s117
    %p128 = scmp.eq.s32.totalorder %s14, 0
    %p129 = por %p127, %p128
    %p130 = scmp.ne.s32.totalorder %s116, %s117
    %p131 = scmp.eq.s32.totalorder %s15, 1
    %p132 = por %p130, %p131
    %p134 = scmp.ne.s32.totalorder %s117, %s133
    %p135 = scmp.eq.s32.totalorder %s15, 0
    %p136 = por %p134, %p135
    %p137 = scmp.le.s32.totalorder 1, %s9
    %p138 = scmp.lt.s32.totalorder %s9, 3
    %p139 = pnand %p137, %p138
    %p140 = pneg %p139
    // Predicated region
    $region9: #{tpu_custom_call.1} parent=5 // pred_check
      _
    $region10: #{tpu_custom_call.1} parent=5 // pred_check_branch
      %142 = sbr.rel (%p139) target = $region12
    $region11: #{tpu_custom_call.1} parent=5 // pred_region
      %s143 = ssub.s32 %s9, 1
    $region12: #{tpu_custom_call.1} parent=5 // pred_fallthru
      _
    %p144 = scmp.lt.s32.totalorder %s9, 2
    // Predicated region
    $region13: #{tpu_custom_call.1} parent=5 // pred_check
      %p145 = pneg %p144
    $region14: #{tpu_custom_call.1} parent=5 // pred_check_branch
      %147 = sbr.rel (%p145) target = $region16
    $region15: #{tpu_custom_call.1} parent=5 // pred_region
      // Predicated region
      $region17: #{tpu_custom_call.1} parent=15 // pred_check
        %p148 = pneg %p43
      $region18: #{tpu_custom_call.1} parent=15 // pred_check_branch
        %150 = sbr.rel (%p148) target = $region20
      $region19: #{tpu_custom_call.1} parent=15 // pred_region
        %s151 = smul.u32 16, %s17
        %p152 = scmp.lt.s32.totalorder %s16, 1
        %s153 = scalar_select %p152, %s16, 1
        %p154 = scmp.lt.s32.totalorder %s151, 15
        %s155 = scalar_select %p154, %s151, 15
        %s156 = smul.addr %s153, 64
        %s157 = sadd.s32 %s155, %s156
        %s158 = smul.addr %s157, 8
        %s159 = scalar_lea.vmem %s0, %s158
        %s160 = smul.u32 16, %s17
      $region20: #{tpu_custom_call.1} parent=15 // pred_fallthru
        _
      // Predicated region
      $region21: #{tpu_custom_call.1} parent=15 // pred_check
        %p161 = pneg %p69
      $region22: #{tpu_custom_call.1} parent=15 // pred_check_branch
        %163 = sbr.rel (%p161) target = $region24
      $region23: #{tpu_custom_call.1} parent=15 // pred_region
        %p164 = scmp.lt.s32.totalorder %s16, 1
        %s165 = scalar_select %p164, %s16, 1
        %s166 = smul.addr %s165, 64
        %s167 = smul.addr %s166, 8
        %s168 = scalar_lea.vmem %s1, %s167
      $region24: #{tpu_custom_call.1} parent=15 // pred_fallthru
        _
      // Predicated region
      $region25: #{tpu_custom_call.1} parent=15 // pred_check
        %p169 = pneg %p95
      $region26: #{tpu_custom_call.1} parent=15 // pred_check_branch
        %171 = sbr.rel (%p169) target = $region28
      $region27: #{tpu_custom_call.1} parent=15 // pred_region
        %p172 = scmp.lt.s32.totalorder %s16, 1
        %s173 = scalar_select %p172, %s16, 1
        %s174 = smul.addr %s173, 64
        %s175 = smul.addr %s174, 8
        %s176 = scalar_lea.vmem %s2, %s175
      $region28: #{tpu_custom_call.1} parent=15 // pred_fallthru
        _
    $region16: #{tpu_custom_call.1} parent=5 // pred_fallthru
      _
    %p177 = scmp.le.s32.totalorder 1, %s9
    %p178 = scmp.lt.s32.totalorder %s9, 3
    %p179 = pnand %p177, %p178
    %p180 = pneg %p179
    // Predicated region
    $region29: #{tpu_custom_call.1} parent=5 // pred_check
      _
    $region30: #{tpu_custom_call.1} parent=5 // pred_check_branch
      %182 = sbr.rel (%p179) target = $region32
    $region31: #{tpu_custom_call.1} parent=5 // pred_region
      %s183 = ssub.s32 %s9, 1
      %s184 = smul.u32 16, %s19
      %p185 = scmp.lt.s32.totalorder %s18, 1
      %s186 = scalar_select %p185, %s18, 1
      %p187 = scmp.lt.s32.totalorder %s184, 15
      %s188 = scalar_select %p187, %s184, 15
      %s189 = smul.addr %s186, 64
      %s190 = sadd.s32 %s188, %s189
      %s191 = smul.addr %s190, 8
      %s192 = scalar_lea.vmem %s0, %s191
      %p193 = pneg %p49
      %p194 = pneg %p46
      %p195 = scmp.lt.s32.totalorder %s18, 1
      %s196 = scalar_select %p195, %s18, 1
      %s197 = smul.addr %s196, 64
      %s198 = smul.addr %s197, 8
      %s199 = scalar_lea.vmem %s1, %s198
      %p200 = pneg %p75
      %p201 = pneg %p72
      %p202 = scmp.lt.s32.totalorder %s18, 1
      %s203 = scalar_select %p202, %s18, 1
      %s204 = smul.addr %s203, 64
      %s205 = smul.addr %s204, 8
      %s206 = scalar_lea.vmem %s2, %s205
      %p207 = pneg %p101
      %p208 = pneg %p98
      %p209 = pneg %p129
      %p210 = pneg %p126
      %s211 = smul.u32 16, %s19
      %p212 = scmp.lt.s32.totalorder %s18, 1
      %s213 = scalar_select %p212, %s18, 1
      %p214 = scmp.lt.s32.totalorder %s211, 15
      %s215 = scalar_select %p214, %s211, 15
      %s216 = smul.addr %s213, 64
      %s217 = sadd.s32 %s215, %s216
      %s218 = smul.addr %s217, 8
      %s219 = scalar_lea.vmem %s3, %s218
      %s220 = smul.u32 16, %s19
      %p221 = scmp.lt.s32.totalorder %s18, 1
      %s222 = scalar_select %p221, %s18, 1
      %p223 = scmp.lt.s32.totalorder %s220, 15
      %s224 = scalar_select %p223, %s220, 15
      %s225 = smul.addr %s222, 64
      %s226 = sadd.s32 %s224, %s225
      %s227 = smul.addr %s226, 8
      %s228 = scalar_lea.vmem %s0, %s227
      %s229 = smul.u32 16, %s19
      %p230 = scmp.lt.s32.totalorder %s18, 1
      %s231 = scalar_select %p230, %s18, 1
      %s232 = smul.addr %s231, 64
      %s233 = smul.addr %s232, 8
      %s234 = scalar_lea.vmem %s1, %s233
      %p235 = scmp.lt.s32.totalorder %s18, 1
      %s236 = scalar_select %p235, %s18, 1
      %s237 = smul.addr %s236, 64
      %s238 = smul.addr %s237, 8
      %s239 = scalar_lea.vmem %s2, %s238
      %s240 = smul.u32 16, %s19
      %p241 = scmp.lt.s32.totalorder %s18, 1
      %s242 = scalar_select %p241, %s18, 1
      %p243 = scmp.lt.s32.totalorder %s240, 15
      %s244 = scalar_select %p243, %s240, 15
      %s245 = smul.addr %s242, 64
      %s246 = sadd.s32 %s244, %s245
      %s247 = smul.addr %s246, 8
      %s248 = scalar_lea.vmem %s3, %s247
      %s249 = smul.u32 16, %s19
      %v250 = vld [vmem:[%s228] sm:$0xff]
      %v251 = vld [vmem:[%s228 + $0x8] sm:$0xff]
      %v252 = vld [vmem:[%s228 + $0x10] sm:$0xff]
      %v253 = vld [vmem:[%s228 + $0x18] sm:$0xff]
      %v254 = vld [vmem:[%s228 + $0x20] sm:$0xff]
      %v255 = vld [vmem:[%s228 + $0x28] sm:$0xff]
      %v256 = vld [vmem:[%s228 + $0x30] sm:$0xff]
      %v257 = vld [vmem:[%s228 + $0x38] sm:$0xff]
      %v258 = vld [vmem:[%s228 + $0x40] sm:$0xff]
      %v259 = vld [vmem:[%s228 + $0x48] sm:$0xff]
      %v260 = vld [vmem:[%s228 + $0x50] sm:$0xff]
      %v261 = vld [vmem:[%s228 + $0x58] sm:$0xff]
      %v262 = vld [vmem:[%s228 + $0x60] sm:$0xff]
      %v263 = vld [vmem:[%s228 + $0x68] sm:$0xff]
      %v264 = vld [vmem:[%s228 + $0x70] sm:$0xff]
      %v265 = vld [vmem:[%s228 + $0x78] sm:$0xff]
      %v266 = vld [vmem:[%s228 + $0x80] sm:$0xff]
      %v267 = vld [vmem:[%s228 + $0x88] sm:$0xff]
      %v268 = vld [vmem:[%s228 + $0x90] sm:$0xff]
      %v269 = vld [vmem:[%s228 + $0x98] sm:$0xff]
      %v270 = vld [vmem:[%s228 + $0xa0] sm:$0xff]
      %v271 = vld [vmem:[%s228 + $0xa8] sm:$0xff]
      %v272 = vld [vmem:[%s228 + $0xb0] sm:$0xff]
      %v273 = vld [vmem:[%s228 + $0xb8] sm:$0xff]
      %v274 = vld [vmem:[%s228 + $0xc0] sm:$0xff]
      %v275 = vld [vmem:[%s228 + $0xc8] sm:$0xff]
      %v276 = vld [vmem:[%s228 + $0xd0] sm:$0xff]
      %v277 = vld [vmem:[%s228 + $0xd8] sm:$0xff]
      %v278 = vld [vmem:[%s228 + $0xe0] sm:$0xff]
      %v279 = vld [vmem:[%s228 + $0xe8] sm:$0xff]
      %v280 = vld [vmem:[%s228 + $0xf0] sm:$0xff]
      %v281 = vld [vmem:[%s228 + $0xf8] sm:$0xff]
      %v282 = vld [vmem:[%s228 + $0x100] sm:$0xff]
      %v283 = vld [vmem:[%s228 + $0x108] sm:$0xff]
      %v284 = vld [vmem:[%s228 + $0x110] sm:$0xff]
      %v285 = vld [vmem:[%s228 + $0x118] sm:$0xff]
      %v286 = vld [vmem:[%s228 + $0x120] sm:$0xff]
      %v287 = vld [vmem:[%s228 + $0x128] sm:$0xff]
      %v288 = vld [vmem:[%s228 + $0x130] sm:$0xff]
      %v289 = vld [vmem:[%s228 + $0x138] sm:$0xff]
      %v290 = vld [vmem:[%s228 + $0x140] sm:$0xff]
      %v291 = vld [vmem:[%s228 + $0x148] sm:$0xff]
      %v292 = vld [vmem:[%s228 + $0x150] sm:$0xff]
      %v293 = vld [vmem:[%s228 + $0x158] sm:$0xff]
      %v294 = vld [vmem:[%s228 + $0x160] sm:$0xff]
      %v295 = vld [vmem:[%s228 + $0x168] sm:$0xff]
      %v296 = vld [vmem:[%s228 + $0x170] sm:$0xff]
      %v297 = vld [vmem:[%s228 + $0x178] sm:$0xff]
      %v298 = vld [vmem:[%s228 + $0x180] sm:$0xff]
      %v299 = vld [vmem:[%s228 + $0x188] sm:$0xff]
      %v300 = vld [vmem:[%s228 + $0x190] sm:$0xff]
      %v301 = vld [vmem:[%s228 + $0x198] sm:$0xff]
      %v302 = vld [vmem:[%s228 + $0x1a0] sm:$0xff]
      %v303 = vld [vmem:[%s228 + $0x1a8] sm:$0xff]
      %v304 = vld [vmem:[%s228 + $0x1b0] sm:$0xff]
      %v305 = vld [vmem:[%s228 + $0x1b8] sm:$0xff]
      %v306 = vld [vmem:[%s228 + $0x1c0] sm:$0xff]
      %v307 = vld [vmem:[%s228 + $0x1c8] sm:$0xff]
      %v308 = vld [vmem:[%s228 + $0x1d0] sm:$0xff]
      %v309 = vld [vmem:[%s228 + $0x1d8] sm:$0xff]
      %v310 = vld [vmem:[%s228 + $0x1e0] sm:$0xff]
      %v311 = vld [vmem:[%s228 + $0x1e8] sm:$0xff]
      %v312 = vld [vmem:[%s228 + $0x1f0] sm:$0xff]
      %v313 = vld [vmem:[%s228 + $0x1f8] sm:$0xff]
      %v314 = vmul.f32 %v250, 0.17677669
      %v315 = vmul.f32 %v251, 0.17677669
      %v316 = vmul.f32 %v252, 0.17677669
      %v317 = vmul.f32 %v253, 0.17677669
      %v318 = vmul.f32 %v254, 0.17677669
      %v319 = vmul.f32 %v255, 0.17677669
      %v320 = vmul.f32 %v256, 0.17677669
      %v321 = vmul.f32 %v257, 0.17677669
      %v322 = vmul.f32 %v258, 0.17677669
      %v323 = vmul.f32 %v259, 0.17677669
      %v324 = vmul.f32 %v260, 0.17677669
      %v325 = vmul.f32 %v261, 0.17677669
      %v326 = vmul.f32 %v262, 0.17677669
      %v327 = vmul.f32 %v263, 0.17677669
      %v328 = vmul.f32 %v264, 0.17677669
      %v329 = vmul.f32 %v265, 0.17677669
      %v330 = vmul.f32 %v266, 0.17677669
      %v331 = vmul.f32 %v267, 0.17677669
      %v332 = vmul.f32 %v268, 0.17677669
      %v333 = vmul.f32 %v269, 0.17677669
      %v334 = vmul.f32 %v270, 0.17677669
      %v335 = vmul.f32 %v271, 0.17677669
      %v336 = vmul.f32 %v272, 0.17677669
      %v337 = vmul.f32 %v273, 0.17677669
      %v338 = vmul.f32 %v274, 0.17677669
      %v339 = vmul.f32 %v275, 0.17677669
      %v340 = vmul.f32 %v276, 0.17677669
      %v341 = vmul.f32 %v277, 0.17677669
      %v342 = vmul.f32 %v278, 0.17677669
      %v343 = vmul.f32 %v279, 0.17677669
      %v344 = vmul.f32 %v280, 0.17677669
      %v345 = vmul.f32 %v281, 0.17677669
      %v346 = vmul.f32 %v282, 0.17677669
      %v347 = vmul.f32 %v283, 0.17677669
      %v348 = vmul.f32 %v284, 0.17677669
      %v349 = vmul.f32 %v285, 0.17677669
      %v350 = vmul.f32 %v286, 0.17677669
      %v351 = vmul.f32 %v287, 0.17677669
      %v352 = vmul.f32 %v288, 0.17677669
      %v353 = vmul.f32 %v289, 0.17677669
      %v354 = vmul.f32 %v290, 0.17677669
      %v355 = vmul.f32 %v291, 0.17677669
      %v356 = vmul.f32 %v292, 0.17677669
      %v357 = vmul.f32 %v293, 0.17677669
      %v358 = vmul.f32 %v294, 0.17677669
      %v359 = vmul.f32 %v295, 0.17677669
      %v360 = vmul.f32 %v296, 0.17677669
      %v361 = vmul.f32 %v297, 0.17677669
      %v362 = vmul.f32 %v298, 0.17677669
      %v363 = vmul.f32 %v299, 0.17677669
      %v364 = vmul.f32 %v300, 0.17677669
      %v365 = vmul.f32 %v301, 0.17677669
      %v366 = vmul.f32 %v302, 0.17677669
      %v367 = vmul.f32 %v303, 0.17677669
      %v368 = vmul.f32 %v304, 0.17677669
      %v369 = vmul.f32 %v305, 0.17677669
      %v370 = vmul.f32 %v306, 0.17677669
      %v371 = vmul.f32 %v307, 0.17677669
      %v372 = vmul.f32 %v308, 0.17677669
      %v373 = vmul.f32 %v309, 0.17677669
      %v374 = vmul.f32 %v310, 0.17677669
      %v375 = vmul.f32 %v311, 0.17677669
      %v376 = vmul.f32 %v312, 0.17677669
      %v377 = vmul.f32 %v313, 0.17677669
      %v378 = vld [vmem:[%s234] sm:$0xff]
      %v379 = vld [vmem:[%s234 + $0x8] sm:$0xff]
      %v380 = vld [vmem:[%s234 + $0x10] sm:$0xff]
      %v381 = vld [vmem:[%s234 + $0x18] sm:$0xff]
      %v382 = vld [vmem:[%s234 + $0x20] sm:$0xff]
      %v383 = vld [vmem:[%s234 + $0x28] sm:$0xff]
      %v384 = vld [vmem:[%s234 + $0x30] sm:$0xff]
      %v385 = vld [vmem:[%s234 + $0x38] sm:$0xff]
      %v386 = vld [vmem:[%s234 + $0x40] sm:$0xff]
      %v387 = vld [vmem:[%s234 + $0x48] sm:$0xff]
      %v388 = vld [vmem:[%s234 + $0x50] sm:$0xff]
      %v389 = vld [vmem:[%s234 + $0x58] sm:$0xff]
      %v390 = vld [vmem:[%s234 + $0x60] sm:$0xff]
      %v391 = vld [vmem:[%s234 + $0x68] sm:$0xff]
      %v392 = vld [vmem:[%s234 + $0x70] sm:$0xff]
      %v393 = vld [vmem:[%s234 + $0x78] sm:$0xff]
      %v394 = vld [vmem:[%s234 + $0x80] sm:$0xff]
      %v395 = vld [vmem:[%s234 + $0x88] sm:$0xff]
      %v396 = vld [vmem:[%s234 + $0x90] sm:$0xff]
      %v397 = vld [vmem:[%s234 + $0x98] sm:$0xff]
      %v398 = vld [vmem:[%s234 + $0xa0] sm:$0xff]
      %v399 = vld [vmem:[%s234 + $0xa8] sm:$0xff]
      %v400 = vld [vmem:[%s234 + $0xb0] sm:$0xff]
      %v401 = vld [vmem:[%s234 + $0xb8] sm:$0xff]
      %v402 = vld [vmem:[%s234 + $0xc0] sm:$0xff]
      %v403 = vld [vmem:[%s234 + $0xc8] sm:$0xff]
      %v404 = vld [vmem:[%s234 + $0xd0] sm:$0xff]
      %v405 = vld [vmem:[%s234 + $0xd8] sm:$0xff]
      %v406 = vld [vmem:[%s234 + $0xe0] sm:$0xff]
      %v407 = vld [vmem:[%s234 + $0xe8] sm:$0xff]
      %v408 = vld [vmem:[%s234 + $0xf0] sm:$0xff]
      %v409 = vld [vmem:[%s234 + $0xf8] sm:$0xff]
      %v410 = vld [vmem:[%s234 + $0x100] sm:$0xff]
      %v411 = vld [vmem:[%s234 + $0x108] sm:$0xff]
      %v412 = vld [vmem:[%s234 + $0x110] sm:$0xff]
      %v413 = vld [vmem:[%s234 + $0x118] sm:$0xff]
      %v414 = vld [vmem:[%s234 + $0x120] sm:$0xff]
      %v415 = vld [vmem:[%s234 + $0x128] sm:$0xff]
      %v416 = vld [vmem:[%s234 + $0x130] sm:$0xff]
      %v417 = vld [vmem:[%s234 + $0x138] sm:$0xff]
      %v418 = vld [vmem:[%s234 + $0x140] sm:$0xff]
      %v419 = vld [vmem:[%s234 + $0x148] sm:$0xff]
      %v420 = vld [vmem:[%s234 + $0x150] sm:$0xff]
      %v421 = vld [vmem:[%s234 + $0x158] sm:$0xff]
      %v422 = vld [vmem:[%s234 + $0x160] sm:$0xff]
      %v423 = vld [vmem:[%s234 + $0x168] sm:$0xff]
      %v424 = vld [vmem:[%s234 + $0x170] sm:$0xff]
      %v425 = vld [vmem:[%s234 + $0x178] sm:$0xff]
      %v426 = vld [vmem:[%s234 + $0x180] sm:$0xff]
      %v427 = vld [vmem:[%s234 + $0x188] sm:$0xff]
      %v428 = vld [vmem:[%s234 + $0x190] sm:$0xff]
      %v429 = vld [vmem:[%s234 + $0x198] sm:$0xff]
      %v430 = vld [vmem:[%s234 + $0x1a0] sm:$0xff]
      %v431 = vld [vmem:[%s234 + $0x1a8] sm:$0xff]
      %v432 = vld [vmem:[%s234 + $0x1b0] sm:$0xff]
      %v433 = vld [vmem:[%s234 + $0x1b8] sm:$0xff]
      %v434 = vld [vmem:[%s234 + $0x1c0] sm:$0xff]
      %v435 = vld [vmem:[%s234 + $0x1c8] sm:$0xff]
      %v436 = vld [vmem:[%s234 + $0x1d0] sm:$0xff]
      %v437 = vld [vmem:[%s234 + $0x1d8] sm:$0xff]
      %v438 = vld [vmem:[%s234 + $0x1e0] sm:$0xff]
      %v439 = vld [vmem:[%s234 + $0x1e8] sm:$0xff]
      %v440 = vld [vmem:[%s234 + $0x1f0] sm:$0xff]
      %v441 = vld [vmem:[%s234 + $0x1f8] sm:$0xff]
      %v442 = vld [vmem:[%s239] sm:$0xff]
      %v443 = vld [vmem:[%s239 + $0x8] sm:$0xff]
      %v444 = vld [vmem:[%s239 + $0x10] sm:$0xff]
      %v445 = vld [vmem:[%s239 + $0x18] sm:$0xff]
      %v446 = vld [vmem:[%s239 + $0x20] sm:$0xff]
      %v447 = vld [vmem:[%s239 + $0x28] sm:$0xff]
      %v448 = vld [vmem:[%s239 + $0x30] sm:$0xff]
      %v449 = vld [vmem:[%s239 + $0x38] sm:$0xff]
      %v450 = vld [vmem:[%s239 + $0x40] sm:$0xff]
      %v451 = vld [vmem:[%s239 + $0x48] sm:$0xff]
      %v452 = vld [vmem:[%s239 + $0x50] sm:$0xff]
      %v453 = vld [vmem:[%s239 + $0x58] sm:$0xff]
      %v454 = vld [vmem:[%s239 + $0x60] sm:$0xff]
      %v455 = vld [vmem:[%s239 + $0x68] sm:$0xff]
      %v456 = vld [vmem:[%s239 + $0x70] sm:$0xff]
      %v457 = vld [vmem:[%s239 + $0x78] sm:$0xff]
      %v458 = vld [vmem:[%s239 + $0x80] sm:$0xff]
      %v459 = vld [vmem:[%s239 + $0x88] sm:$0xff]
      %v460 = vld [vmem:[%s239 + $0x90] sm:$0xff]
      %v461 = vld [vmem:[%s239 + $0x98] sm:$0xff]
      %v462 = vld [vmem:[%s239 + $0xa0] sm:$0xff]
      %v463 = vld [vmem:[%s239 + $0xa8] sm:$0xff]
      %v464 = vld [vmem:[%s239 + $0xb0] sm:$0xff]
      %v465 = vld [vmem:[%s239 + $0xb8] sm:$0xff]
      %v466 = vld [vmem:[%s239 + $0xc0] sm:$0xff]
      %v467 = vld [vmem:[%s239 + $0xc8] sm:$0xff]
      %v468 = vld [vmem:[%s239 + $0xd0] sm:$0xff]
      %v469 = vld [vmem:[%s239 + $0xd8] sm:$0xff]
      %v470 = vld [vmem:[%s239 + $0xe0] sm:$0xff]
      %v471 = vld [vmem:[%s239 + $0xe8] sm:$0xff]
      %v472 = vld [vmem:[%s239 + $0xf0] sm:$0xff]
      %v473 = vld [vmem:[%s239 + $0xf8] sm:$0xff]
      %v474 = vld [vmem:[%s239 + $0x100] sm:$0xff]
      %v475 = vld [vmem:[%s239 + $0x108] sm:$0xff]
      %v476 = vld [vmem:[%s239 + $0x110] sm:$0xff]
      %v477 = vld [vmem:[%s239 + $0x118] sm:$0xff]
      %v478 = vld [vmem:[%s239 + $0x120] sm:$0xff]
      %v479 = vld [vmem:[%s239 + $0x128] sm:$0xff]
      %v480 = vld [vmem:[%s239 + $0x130] sm:$0xff]
      %v481 = vld [vmem:[%s239 + $0x138] sm:$0xff]
      %v482 = vld [vmem:[%s239 + $0x140] sm:$0xff]
      %v483 = vld [vmem:[%s239 + $0x148] sm:$0xff]
      %v484 = vld [vmem:[%s239 + $0x150] sm:$0xff]
      %v485 = vld [vmem:[%s239 + $0x158] sm:$0xff]
      %v486 = vld [vmem:[%s239 + $0x160] sm:$0xff]
      %v487 = vld [vmem:[%s239 + $0x168] sm:$0xff]
      %v488 = vld [vmem:[%s239 + $0x170] sm:$0xff]
      %v489 = vld [vmem:[%s239 + $0x178] sm:$0xff]
      %v490 = vld [vmem:[%s239 + $0x180] sm:$0xff]
      %v491 = vld [vmem:[%s239 + $0x188] sm:$0xff]
      %v492 = vld [vmem:[%s239 + $0x190] sm:$0xff]
      %v493 = vld [vmem:[%s239 + $0x198] sm:$0xff]
      %v494 = vld [vmem:[%s239 + $0x1a0] sm:$0xff]
      %v495 = vld [vmem:[%s239 + $0x1a8] sm:$0xff]
      %v496 = vld [vmem:[%s239 + $0x1b0] sm:$0xff]
      %v497 = vld [vmem:[%s239 + $0x1b8] sm:$0xff]
      %v498 = vld [vmem:[%s239 + $0x1c0] sm:$0xff]
      %v499 = vld [vmem:[%s239 + $0x1c8] sm:$0xff]
      %v500 = vld [vmem:[%s239 + $0x1d0] sm:$0xff]
      %v501 = vld [vmem:[%s239 + $0x1d8] sm:$0xff]
      %v502 = vld [vmem:[%s239 + $0x1e0] sm:$0xff]
      %v503 = vld [vmem:[%s239 + $0x1e8] sm:$0xff]
      %v504 = vld [vmem:[%s239 + $0x1f0] sm:$0xff]
      %v505 = vld [vmem:[%s239 + $0x1f8] sm:$0xff]
      %vm506 = vcmask 261120
      %v508 = vsel %vm506, %v314, 0
      %v511 = vsel %vm506, %v315, 0
      %v514 = vsel %vm506, %v316, 0
      %v517 = vsel %vm506, %v317, 0
      %v520 = vsel %vm506, %v318, 0
      %v523 = vsel %vm506, %v319, 0
      %v526 = vsel %vm506, %v320, 0
      %v529 = vsel %vm506, %v321, 0
      %v532 = vsel %vm506, %v322, 0
      %v535 = vsel %vm506, %v323, 0
      %v538 = vsel %vm506, %v324, 0
      %v541 = vsel %vm506, %v325, 0
      %v544 = vsel %vm506, %v326, 0
      %v547 = vsel %vm506, %v327, 0
      %v550 = vsel %vm506, %v328, 0
      %v553 = vsel %vm506, %v329, 0
      %v556 = vsel %vm506, %v378, 0
      %v559 = vsel %vm506, %v379, 0
      %v562 = vsel %vm506, %v380, 0
      %v565 = vsel %vm506, %v381, 0
      %v568 = vsel %vm506, %v382, 0
      %v571 = vsel %vm506, %v383, 0
      %v574 = vsel %vm506, %v384, 0
      %v577 = vsel %vm506, %v385, 0
      %v580 = vsel %vm506, %v386, 0
      %v583 = vsel %vm506, %v387, 0
      %v586 = vsel %vm506, %v388, 0
      %v589 = vsel %vm506, %v389, 0
      %v592 = vsel %vm506, %v390, 0
      %v595 = vsel %vm506, %v391, 0
      %v598 = vsel %vm506, %v392, 0
      %v601 = vsel %vm506, %v393, 0
      %603 = vmatpush.xpose.msra.mxu0 %v601
      %604 = vmatpush.xpose.msra.mxu0 %v598
      %605 = vmatpush.xpose.msra.mxu0 %v595
      %606 = vmatpush.xpose.msra.mxu0 %v592
      %607 = vmatpush.xpose.msra.mxu0 %v589
      %608 = vmatpush.xpose.msra.mxu0 %v586
      %609 = vmatpush.xpose.msra.mxu0 %v583
      %610 = vmatpush.xpose.msra.mxu0 %v580
      %611 = vmatpush.xpose.msra.mxu0 %v577
      %612 = vmatpush.xpose.msra.mxu0 %v574
      %613 = vmatpush.xpose.msra.mxu0 %v571
      %614 = vmatpush.xpose.msra.mxu0 %v568
      %615 = vmatpush.xpose.msra.mxu0 %v565
      %616 = vmatpush.xpose.msra.mxu0 %v562
      %617 = vmatpush.xpose.msra.mxu0 %v559
      %618 = vmatpush.xpose.msra.mxu0 %v556
      %619 = vmatmul.f32.gmra.mxu0 %v508
      %v620 = vpop.f32.mrf.mxu0
      %v621 = vadd.f32 0.0, %v620
      %622 = vmatmul.f32.gmra.mxu0 %v511
      %v623 = vpop.f32.mrf.mxu0
      %v624 = vadd.f32 0.0, %v623
      %625 = vmatmul.f32.gmra.mxu0 %v514
      %v626 = vpop.f32.mrf.mxu0
      %v627 = vadd.f32 0.0, %v626
      %628 = vmatmul.f32.gmra.mxu0 %v517
      %v629 = vpop.f32.mrf.mxu0
      %v630 = vadd.f32 0.0, %v629
      %631 = vmatmul.f32.gmra.mxu0 %v520
      %v632 = vpop.f32.mrf.mxu0
      %v633 = vadd.f32 0.0, %v632
      %634 = vmatmul.f32.gmra.mxu0 %v523
      %v635 = vpop.f32.mrf.mxu0
      %v636 = vadd.f32 0.0, %v635
      %637 = vmatmul.f32.gmra.mxu0 %v526
      %v638 = vpop.f32.mrf.mxu0
      %v639 = vadd.f32 0.0, %v638
      %640 = vmatmul.f32.gmra.mxu0 %v529
      %v641 = vpop.f32.mrf.mxu0
      %v642 = vadd.f32 0.0, %v641
      %643 = vmatmul.f32.gmra.mxu0 %v532
      %v644 = vpop.f32.mrf.mxu0
      %v645 = vadd.f32 0.0, %v644
      %646 = vmatmul.f32.gmra.mxu0 %v535
      %v647 = vpop.f32.mrf.mxu0
      %v648 = vadd.f32 0.0, %v647
      %649 = vmatmul.f32.gmra.mxu0 %v538
      %v650 = vpop.f32.mrf.mxu0
      %v651 = vadd.f32 0.0, %v650
      %652 = vmatmul.f32.gmra.mxu0 %v541
      %v653 = vpop.f32.mrf.mxu0
      %v654 = vadd.f32 0.0, %v653
      %655 = vmatmul.f32.gmra.mxu0 %v544
      %v656 = vpop.f32.mrf.mxu0
      %v657 = vadd.f32 0.0, %v656
      %658 = vmatmul.f32.gmra.mxu0 %v547
      %v659 = vpop.f32.mrf.mxu0
      %v660 = vadd.f32 0.0, %v659
      %661 = vmatmul.f32.gmra.mxu0 %v550
      %v662 = vpop.f32.mrf.mxu0
      %v663 = vadd.f32 0.0, %v662
      %664 = vmatmul.f32.gmra.mxu0 %v553
      %v665 = vpop.f32.mrf.mxu0
      %v666 = vadd.f32 0.0, %v665
      %667 = vdwg.mxu0
      %v669 = vsel %vm506, %v330, 0
      %v672 = vsel %vm506, %v331, 0
      %v675 = vsel %vm506, %v332, 0
      %v678 = vsel %vm506, %v333, 0
      %v681 = vsel %vm506, %v334, 0
      %v684 = vsel %vm506, %v335, 0
      %v687 = vsel %vm506, %v336, 0
      %v690 = vsel %vm506, %v337, 0
      %v693 = vsel %vm506, %v338, 0
      %v696 = vsel %vm506, %v339, 0
      %v699 = vsel %vm506, %v340, 0
      %v702 = vsel %vm506, %v341, 0
      %v705 = vsel %vm506, %v342, 0
      %v708 = vsel %vm506, %v343, 0
      %v711 = vsel %vm506, %v344, 0
      %v714 = vsel %vm506, %v345, 0
      %v717 = vsel %vm506, %v394, 0
      %v720 = vsel %vm506, %v395, 0
      %v723 = vsel %vm506, %v396, 0
      %v726 = vsel %vm506, %v397, 0
      %v729 = vsel %vm506, %v398, 0
      %v732 = vsel %vm506, %v399, 0
      %v735 = vsel %vm506, %v400, 0
      %v738 = vsel %vm506, %v401, 0
      %v741 = vsel %vm506, %v402, 0
      %v744 = vsel %vm506, %v403, 0
      %v747 = vsel %vm506, %v404, 0
      %v750 = vsel %vm506, %v405, 0
      %v753 = vsel %vm506, %v406, 0
      %v756 = vsel %vm506, %v407, 0
      %v759 = vsel %vm506, %v408, 0
      %v762 = vsel %vm506, %v409, 0
      %764 = vmatpush.xpose.msra.mxu0 %v762
      %765 = vmatpush.xpose.msra.mxu0 %v759
      %766 = vmatpush.xpose.msra.mxu0 %v756
      %767 = vmatpush.xpose.msra.mxu0 %v753
      %768 = vmatpush.xpose.msra.mxu0 %v750
      %769 = vmatpush.xpose.msra.mxu0 %v747
      %770 = vmatpush.xpose.msra.mxu0 %v744
      %771 = vmatpush.xpose.msra.mxu0 %v741
      %772 = vmatpush.xpose.msra.mxu0 %v738
      %773 = vmatpush.xpose.msra.mxu0 %v735
      %774 = vmatpush.xpose.msra.mxu0 %v732
      %775 = vmatpush.xpose.msra.mxu0 %v729
      %776 = vmatpush.xpose.msra.mxu0 %v726
      %777 = vmatpush.xpose.msra.mxu0 %v723
      %778 = vmatpush.xpose.msra.mxu0 %v720
      %779 = vmatpush.xpose.msra.mxu0 %v717
      %780 = vmatmul.f32.gmra.mxu0 %v669
      %v781 = vpop.f32.mrf.mxu0
      %v782 = vadd.f32 0.0, %v781
      %783 = vmatmul.f32.gmra.mxu0 %v672
      %v784 = vpop.f32.mrf.mxu0
      %v785 = vadd.f32 0.0, %v784
      %786 = vmatmul.f32.gmra.mxu0 %v675
      %v787 = vpop.f32.mrf.mxu0
      %v788 = vadd.f32 0.0, %v787
      %789 = vmatmul.f32.gmra.mxu0 %v678
      %v790 = vpop.f32.mrf.mxu0
      %v791 = vadd.f32 0.0, %v790
      %792 = vmatmul.f32.gmra.mxu0 %v681
      %v793 = vpop.f32.mrf.mxu0
      %v794 = vadd.f32 0.0, %v793
      %795 = vmatmul.f32.gmra.mxu0 %v684
      %v796 = vpop.f32.mrf.mxu0
      %v797 = vadd.f32 0.0, %v796
      %798 = vmatmul.f32.gmra.mxu0 %v687
      %v799 = vpop.f32.mrf.mxu0
      %v800 = vadd.f32 0.0, %v799
      %801 = vmatmul.f32.gmra.mxu0 %v690
      %v802 = vpop.f32.mrf.mxu0
      %v803 = vadd.f32 0.0, %v802
      %804 = vmatmul.f32.gmra.mxu0 %v693
      %v805 = vpop.f32.mrf.mxu0
      %v806 = vadd.f32 0.0, %v805
      %807 = vmatmul.f32.gmra.mxu0 %v696
      %v808 = vpop.f32.mrf.mxu0
      %v809 = vadd.f32 0.0, %v808
      %810 = vmatmul.f32.gmra.mxu0 %v699
      %v811 = vpop.f32.mrf.mxu0
      %v812 = vadd.f32 0.0, %v811
      %813 = vmatmul.f32.gmra.mxu0 %v702
      %v814 = vpop.f32.mrf.mxu0
      %v815 = vadd.f32 0.0, %v814
      %816 = vmatmul.f32.gmra.mxu0 %v705
      %v817 = vpop.f32.mrf.mxu0
      %v818 = vadd.f32 0.0, %v817
      %819 = vmatmul.f32.gmra.mxu0 %v708
      %v820 = vpop.f32.mrf.mxu0
      %v821 = vadd.f32 0.0, %v820
      %822 = vmatmul.f32.gmra.mxu0 %v711
      %v823 = vpop.f32.mrf.mxu0
      %v824 = vadd.f32 0.0, %v823
      %825 = vmatmul.f32.gmra.mxu0 %v714
      %v826 = vpop.f32.mrf.mxu0
      %v827 = vadd.f32 0.0, %v826
      %828 = vdwg.mxu0
      %v830 = vsel %vm506, %v346, 0
      %v833 = vsel %vm506, %v347, 0
      %v836 = vsel %vm506, %v348, 0
      %v839 = vsel %vm506, %v349, 0
      %v842 = vsel %vm506, %v350, 0
      %v845 = vsel %vm506, %v351, 0
      %v848 = vsel %vm506, %v352, 0
      %v851 = vsel %vm506, %v353, 0
      %v854 = vsel %vm506, %v354, 0
      %v857 = vsel %vm506, %v355, 0
      %v860 = vsel %vm506, %v356, 0
      %v863 = vsel %vm506, %v357, 0
      %v866 = vsel %vm506, %v358, 0
      %v869 = vsel %vm506, %v359, 0
      %v872 = vsel %vm506, %v360, 0
      %v875 = vsel %vm506, %v361, 0
      %v878 = vsel %vm506, %v410, 0
      %v881 = vsel %vm506, %v411, 0
      %v884 = vsel %vm506, %v412, 0
      %v887 = vsel %vm506, %v413, 0
      %v890 = vsel %vm506, %v414, 0
      %v893 = vsel %vm506, %v415, 0
      %v896 = vsel %vm506, %v416, 0
      %v899 = vsel %vm506, %v417, 0
      %v902 = vsel %vm506, %v418, 0
      %v905 = vsel %vm506, %v419, 0
      %v908 = vsel %vm506, %v420, 0
      %v911 = vsel %vm506, %v421, 0
      %v914 = vsel %vm506, %v422, 0
      %v917 = vsel %vm506, %v423, 0
      %v920 = vsel %vm506, %v424, 0
      %v923 = vsel %vm506, %v425, 0
      %925 = vmatpush.xpose.msra.mxu0 %v923
      %926 = vmatpush.xpose.msra.mxu0 %v920
      %927 = vmatpush.xpose.msra.mxu0 %v917
      %928 = vmatpush.xpose.msra.mxu0 %v914
      %929 = vmatpush.xpose.msra.mxu0 %v911
      %930 = vmatpush.xpose.msra.mxu0 %v908
      %931 = vmatpush.xpose.msra.mxu0 %v905
      %932 = vmatpush.xpose.msra.mxu0 %v902
      %933 = vmatpush.xpose.msra.mxu0 %v899
      %934 = vmatpush.xpose.msra.mxu0 %v896
      %935 = vmatpush.xpose.msra.mxu0 %v893
      %936 = vmatpush.xpose.msra.mxu0 %v890
      %937 = vmatpush.xpose.msra.mxu0 %v887
      %938 = vmatpush.xpose.msra.mxu0 %v884
      %939 = vmatpush.xpose.msra.mxu0 %v881
      %940 = vmatpush.xpose.msra.mxu0 %v878
      %941 = vmatmul.f32.gmra.mxu0 %v830
      %v942 = vpop.f32.mrf.mxu0
      %v943 = vadd.f32 0.0, %v942
      %944 = vmatmul.f32.gmra.mxu0 %v833
      %v945 = vpop.f32.mrf.mxu0
      %v946 = vadd.f32 0.0, %v945
      %947 = vmatmul.f32.gmra.mxu0 %v836
      %v948 = vpop.f32.mrf.mxu0
      %v949 = vadd.f32 0.0, %v948
      %950 = vmatmul.f32.gmra.mxu0 %v839
      %v951 = vpop.f32.mrf.mxu0
      %v952 = vadd.f32 0.0, %v951
      %953 = vmatmul.f32.gmra.mxu0 %v842
      %v954 = vpop.f32.mrf.mxu0
      %v955 = vadd.f32 0.0, %v954
      %956 = vmatmul.f32.gmra.mxu0 %v845
      %v957 = vpop.f32.mrf.mxu0
      %v958 = vadd.f32 0.0, %v957
      %959 = vmatmul.f32.gmra.mxu0 %v848
      %v960 = vpop.f32.mrf.mxu0
      %v961 = vadd.f32 0.0, %v960
      %962 = vmatmul.f32.gmra.mxu0 %v851
      %v963 = vpop.f32.mrf.mxu0
      %v964 = vadd.f32 0.0, %v963
      %965 = vmatmul.f32.gmra.mxu0 %v854
      %v966 = vpop.f32.mrf.mxu0
      %v967 = vadd.f32 0.0, %v966
      %968 = vmatmul.f32.gmra.mxu0 %v857
      %v969 = vpop.f32.mrf.mxu0
      %v970 = vadd.f32 0.0, %v969
      %971 = vmatmul.f32.gmra.mxu0 %v860
      %v972 = vpop.f32.mrf.mxu0
      %v973 = vadd.f32 0.0, %v972
      %974 = vmatmul.f32.gmra.mxu0 %v863
      %v975 = vpop.f32.mrf.mxu0
      %v976 = vadd.f32 0.0, %v975
      %977 = vmatmul.f32.gmra.mxu0 %v866
      %v978 = vpop.f32.mrf.mxu0
      %v979 = vadd.f32 0.0, %v978
      %980 = vmatmul.f32.gmra.mxu0 %v869
      %v981 = vpop.f32.mrf.mxu0
      %v982 = vadd.f32 0.0, %v981
      %983 = vmatmul.f32.gmra.mxu0 %v872
      %v984 = vpop.f32.mrf.mxu0
      %v985 = vadd.f32 0.0, %v984
      %986 = vmatmul.f32.gmra.mxu0 %v875
      %v987 = vpop.f32.mrf.mxu0
      %v988 = vadd.f32 0.0, %v987
      %989 = vdwg.mxu0
      %v991 = vsel %vm506, %v362, 0
      %v994 = vsel %vm506, %v363, 0
      %v997 = vsel %vm506, %v364, 0
      %v1000 = vsel %vm506, %v365, 0
      %v1003 = vsel %vm506, %v366, 0
      %v1006 = vsel %vm506, %v367, 0
      %v1009 = vsel %vm506, %v368, 0
      %v1012 = vsel %vm506, %v369, 0
      %v1015 = vsel %vm506, %v370, 0
      %v1018 = vsel %vm506, %v371, 0
      %v1021 = vsel %vm506, %v372, 0
      %v1024 = vsel %vm506, %v373, 0
      %v1027 = vsel %vm506, %v374, 0
      %v1030 = vsel %vm506, %v375, 0
      %v1033 = vsel %vm506, %v376, 0
      %v1036 = vsel %vm506, %v377, 0
      %v1039 = vsel %vm506, %v426, 0
      %v1042 = vsel %vm506, %v427, 0
      %v1045 = vsel %vm506, %v428, 0
      %v1048 = vsel %vm506, %v429, 0
      %v1051 = vsel %vm506, %v430, 0
      %v1054 = vsel %vm506, %v431, 0
      %v1057 = vsel %vm506, %v432, 0
      %v1060 = vsel %vm506, %v433, 0
      %v1063 = vsel %vm506, %v434, 0
      %v1066 = vsel %vm506, %v435, 0
      %v1069 = vsel %vm506, %v436, 0
      %v1072 = vsel %vm506, %v437, 0
      %v1075 = vsel %vm506, %v438, 0
      %v1078 = vsel %vm506, %v439, 0
      %v1081 = vsel %vm506, %v440, 0
      %v1084 = vsel %vm506, %v441, 0
      %1086 = vmatpush.xpose.msra.mxu0 %v1084
      %1087 = vmatpush.xpose.msra.mxu0 %v1081
      %1088 = vmatpush.xpose.msra.mxu0 %v1078
      %1089 = vmatpush.xpose.msra.mxu0 %v1075
      %1090 = vmatpush.xpose.msra.mxu0 %v1072
      %1091 = vmatpush.xpose.msra.mxu0 %v1069
      %1092 = vmatpush.xpose.msra.mxu0 %v1066
      %1093 = vmatpush.xpose.msra.mxu0 %v1063
      %1094 = vmatpush.xpose.msra.mxu0 %v1060
      %1095 = vmatpush.xpose.msra.mxu0 %v1057
      %1096 = vmatpush.xpose.msra.mxu0 %v1054
      %1097 = vmatpush.xpose.msra.mxu0 %v1051
      %1098 = vmatpush.xpose.msra.mxu0 %v1048
      %1099 = vmatpush.xpose.msra.mxu0 %v1045
      %1100 = vmatpush.xpose.msra.mxu0 %v1042
      %1101 = vmatpush.xpose.msra.mxu0 %v1039
      %1102 = vmatmul.f32.gmra.mxu0 %v991
      %v1103 = vpop.f32.mrf.mxu0
      %v1104 = vadd.f32 0.0, %v1103
      %1105 = vmatmul.f32.gmra.mxu0 %v994
      %v1106 = vpop.f32.mrf.mxu0
      %v1107 = vadd.f32 0.0, %v1106
      %1108 = vmatmul.f32.gmra.mxu0 %v997
      %v1109 = vpop.f32.mrf.mxu0
      %v1110 = vadd.f32 0.0, %v1109
      %1111 = vmatmul.f32.gmra.mxu0 %v1000
      %v1112 = vpop.f32.mrf.mxu0
      %v1113 = vadd.f32 0.0, %v1112
      %1114 = vmatmul.f32.gmra.mxu0 %v1003
      %v1115 = vpop.f32.mrf.mxu0
      %v1116 = vadd.f32 0.0, %v1115
      %1117 = vmatmul.f32.gmra.mxu0 %v1006
      %v1118 = vpop.f32.mrf.mxu0
      %v1119 = vadd.f32 0.0, %v1118
      %1120 = vmatmul.f32.gmra.mxu0 %v1009
      %v1121 = vpop.f32.mrf.mxu0
      %v1122 = vadd.f32 0.0, %v1121
      %1123 = vmatmul.f32.gmra.mxu0 %v1012
      %v1124 = vpop.f32.mrf.mxu0
      %v1125 = vadd.f32 0.0, %v1124
      %1126 = vmatmul.f32.gmra.mxu0 %v1015
      %v1127 = vpop.f32.mrf.mxu0
      %v1128 = vadd.f32 0.0, %v1127
      %1129 = vmatmul.f32.gmra.mxu0 %v1018
      %v1130 = vpop.f32.mrf.mxu0
      %v1131 = vadd.f32 0.0, %v1130
      %1132 = vmatmul.f32.gmra.mxu0 %v1021
      %v1133 = vpop.f32.mrf.mxu0
      %v1134 = vadd.f32 0.0, %v1133
      %1135 = vmatmul.f32.gmra.mxu0 %v1024
      %v1136 = vpop.f32.mrf.mxu0
      %v1137 = vadd.f32 0.0, %v1136
      %1138 = vmatmul.f32.gmra.mxu0 %v1027
      %v1139 = vpop.f32.mrf.mxu0
      %v1140 = vadd.f32 0.0, %v1139
      %1141 = vmatmul.f32.gmra.mxu0 %v1030
      %v1142 = vpop.f32.mrf.mxu0
      %v1143 = vadd.f32 0.0, %v1142
      %1144 = vmatmul.f32.gmra.mxu0 %v1033
      %v1145 = vpop.f32.mrf.mxu0
      %v1146 = vadd.f32 0.0, %v1145
      %1147 = vmatmul.f32.gmra.mxu0 %v1036
      %v1148 = vpop.f32.mrf.mxu0
      %v1149 = vadd.f32 0.0, %v1148
      %1150 = vdwg.mxu0
      %1151 = vmax.xlane.f32.xlu0 %v621
      %v1152 = vpop.xlane.xlu0 %1151
      %1153 = vmax.xlane.f32.xlu0 %v624
      %v1154 = vpop.xlane.xlu0 %1153
      %1155 = vmax.xlane.f32.xlu0 %v627
      %v1156 = vpop.xlane.xlu0 %1155
      %1157 = vmax.xlane.f32.xlu0 %v630
      %v1158 = vpop.xlane.xlu0 %1157
      %1159 = vmax.xlane.f32.xlu0 %v633
      %v1160 = vpop.xlane.xlu0 %1159
      %1161 = vmax.xlane.f32.xlu0 %v636
      %v1162 = vpop.xlane.xlu0 %1161
      %1163 = vmax.xlane.f32.xlu0 %v639
      %v1164 = vpop.xlane.xlu0 %1163
      %1165 = vmax.xlane.f32.xlu0 %v642
      %v1166 = vpop.xlane.xlu0 %1165
      %1167 = vmax.xlane.f32.xlu0 %v645
      %v1168 = vpop.xlane.xlu0 %1167
      %1169 = vmax.xlane.f32.xlu0 %v648
      %v1170 = vpop.xlane.xlu0 %1169
      %1171 = vmax.xlane.f32.xlu0 %v651
      %v1172 = vpop.xlane.xlu0 %1171
      %1173 = vmax.xlane.f32.xlu0 %v654
      %v1174 = vpop.xlane.xlu0 %1173
      %1175 = vmax.xlane.f32.xlu0 %v657
      %v1176 = vpop.xlane.xlu0 %1175
      %1177 = vmax.xlane.f32.xlu0 %v660
      %v1178 = vpop.xlane.xlu0 %1177
      %1179 = vmax.xlane.f32.xlu0 %v663
      %v1180 = vpop.xlane.xlu0 %1179
      %1181 = vmax.xlane.f32.xlu0 %v666
      %v1182 = vpop.xlane.xlu0 %1181
      %1183 = vmax.xlane.f32.xlu0 %v782
      %v1184 = vpop.xlane.xlu0 %1183
      %1185 = vmax.xlane.f32.xlu0 %v785
      %v1186 = vpop.xlane.xlu0 %1185
      %1187 = vmax.xlane.f32.xlu0 %v788
      %v1188 = vpop.xlane.xlu0 %1187
      %1189 = vmax.xlane.f32.xlu0 %v791
      %v1190 = vpop.xlane.xlu0 %1189
      %1191 = vmax.xlane.f32.xlu0 %v794
      %v1192 = vpop.xlane.xlu0 %1191
      %1193 = vmax.xlane.f32.xlu0 %v797
      %v1194 = vpop.xlane.xlu0 %1193
      %1195 = vmax.xlane.f32.xlu0 %v800
      %v1196 = vpop.xlane.xlu0 %1195
      %1197 = vmax.xlane.f32.xlu0 %v803
      %v1198 = vpop.xlane.xlu0 %1197
      %1199 = vmax.xlane.f32.xlu0 %v806
      %v1200 = vpop.xlane.xlu0 %1199
      %1201 = vmax.xlane.f32.xlu0 %v809
      %v1202 = vpop.xlane.xlu0 %1201
      %1203 = vmax.xlane.f32.xlu0 %v812
      %v1204 = vpop.xlane.xlu0 %1203
      %1205 = vmax.xlane.f32.xlu0 %v815
      %v1206 = vpop.xlane.xlu0 %1205
      %1207 = vmax.xlane.f32.xlu0 %v818
      %v1208 = vpop.xlane.xlu0 %1207
      %1209 = vmax.xlane.f32.xlu0 %v821
      %v1210 = vpop.xlane.xlu0 %1209
      %1211 = vmax.xlane.f32.xlu0 %v824
      %v1212 = vpop.xlane.xlu0 %1211
      %1213 = vmax.xlane.f32.xlu0 %v827
      %v1214 = vpop.xlane.xlu0 %1213
      %1215 = vmax.xlane.f32.xlu0 %v943
      %v1216 = vpop.xlane.xlu0 %1215
      %1217 = vmax.xlane.f32.xlu0 %v946
      %v1218 = vpop.xlane.xlu0 %1217
      %1219 = vmax.xlane.f32.xlu0 %v949
      %v1220 = vpop.xlane.xlu0 %1219
      %1221 = vmax.xlane.f32.xlu0 %v952
      %v1222 = vpop.xlane.xlu0 %1221
      %1223 = vmax.xlane.f32.xlu0 %v955
      %v1224 = vpop.xlane.xlu0 %1223
      %1225 = vmax.xlane.f32.xlu0 %v958
      %v1226 = vpop.xlane.xlu0 %1225
      %1227 = vmax.xlane.f32.xlu0 %v961
      %v1228 = vpop.xlane.xlu0 %1227
      %1229 = vmax.xlane.f32.xlu0 %v964
      %v1230 = vpop.xlane.xlu0 %1229
      %1231 = vmax.xlane.f32.xlu0 %v967
      %v1232 = vpop.xlane.xlu0 %1231
      %1233 = vmax.xlane.f32.xlu0 %v970
      %v1234 = vpop.xlane.xlu0 %1233
      %1235 = vmax.xlane.f32.xlu0 %v973
      %v1236 = vpop.xlane.xlu0 %1235
      %1237 = vmax.xlane.f32.xlu0 %v976
      %v1238 = vpop.xlane.xlu0 %1237
      %1239 = vmax.xlane.f32.xlu0 %v979
      %v1240 = vpop.xlane.xlu0 %1239
      %1241 = vmax.xlane.f32.xlu0 %v982
      %v1242 = vpop.xlane.xlu0 %1241
      %1243 = vmax.xlane.f32.xlu0 %v985
      %v1244 = vpop.xlane.xlu0 %1243
      %1245 = vmax.xlane.f32.xlu0 %v988
      %v1246 = vpop.xlane.xlu0 %1245
      %1247 = vmax.xlane.f32.xlu0 %v1104
      %v1248 = vpop.xlane.xlu0 %1247
      %1249 = vmax.xlane.f32.xlu0 %v1107
      %v1250 = vpop.xlane.xlu0 %1249
      %1251 = vmax.xlane.f32.xlu0 %v1110
      %v1252 = vpop.xlane.xlu0 %1251
      %1253 = vmax.xlane.f32.xlu0 %v1113
      %v1254 = vpop.xlane.xlu0 %1253
      %1255 = vmax.xlane.f32.xlu0 %v1116
      %v1256 = vpop.xlane.xlu0 %1255
      %1257 = vmax.xlane.f32.xlu0 %v1119
      %v1258 = vpop.xlane.xlu0 %1257
      %1259 = vmax.xlane.f32.xlu0 %v1122
      %v1260 = vpop.xlane.xlu0 %1259
      %1261 = vmax.xlane.f32.xlu0 %v1125
      %v1262 = vpop.xlane.xlu0 %1261
      %1263 = vmax.xlane.f32.xlu0 %v1128
      %v1264 = vpop.xlane.xlu0 %1263
      %1265 = vmax.xlane.f32.xlu0 %v1131
      %v1266 = vpop.xlane.xlu0 %1265
      %1267 = vmax.xlane.f32.xlu0 %v1134
      %v1268 = vpop.xlane.xlu0 %1267
      %1269 = vmax.xlane.f32.xlu0 %v1137
      %v1270 = vpop.xlane.xlu0 %1269
      %1271 = vmax.xlane.f32.xlu0 %v1140
      %v1272 = vpop.xlane.xlu0 %1271
      %1273 = vmax.xlane.f32.xlu0 %v1143
      %v1274 = vpop.xlane.xlu0 %1273
      %1275 = vmax.xlane.f32.xlu0 %v1146
      %v1276 = vpop.xlane.xlu0 %1275
      %1277 = vmax.xlane.f32.xlu0 %v1149
      %v1278 = vpop.xlane.xlu0 %1277
      %v1279 = vsub.f32 %v621, %v1152
      %v1280 = vsub.f32 %v624, %v1154
      %v1281 = vsub.f32 %v627, %v1156
      %v1282 = vsub.f32 %v630, %v1158
      %v1283 = vsub.f32 %v633, %v1160
      %v1284 = vsub.f32 %v636, %v1162
      %v1285 = vsub.f32 %v639, %v1164
      %v1286 = vsub.f32 %v642, %v1166
      %v1287 = vsub.f32 %v645, %v1168
      %v1288 = vsub.f32 %v648, %v1170
      %v1289 = vsub.f32 %v651, %v1172
      %v1290 = vsub.f32 %v654, %v1174
      %v1291 = vsub.f32 %v657, %v1176
      %v1292 = vsub.f32 %v660, %v1178
      %v1293 = vsub.f32 %v663, %v1180
      %v1294 = vsub.f32 %v666, %v1182
      %v1295 = vsub.f32 %v782, %v1184
      %v1296 = vsub.f32 %v785, %v1186
      %v1297 = vsub.f32 %v788, %v1188
      %v1298 = vsub.f32 %v791, %v1190
      %v1299 = vsub.f32 %v794, %v1192
      %v1300 = vsub.f32 %v797, %v1194
      %v1301 = vsub.f32 %v800, %v1196
      %v1302 = vsub.f32 %v803, %v1198
      %v1303 = vsub.f32 %v806, %v1200
      %v1304 = vsub.f32 %v809, %v1202
      %v1305 = vsub.f32 %v812, %v1204
      %v1306 = vsub.f32 %v815, %v1206
      %v1307 = vsub.f32 %v818, %v1208
      %v1308 = vsub.f32 %v821, %v1210
      %v1309 = vsub.f32 %v824, %v1212
      %v1310 = vsub.f32 %v827, %v1214
      %v1311 = vsub.f32 %v943, %v1216
      %v1312 = vsub.f32 %v946, %v1218
      %v1313 = vsub.f32 %v949, %v1220
      %v1314 = vsub.f32 %v952, %v1222
      %v1315 = vsub.f32 %v955, %v1224
      %v1316 = vsub.f32 %v958, %v1226
      %v1317 = vsub.f32 %v961, %v1228
      %v1318 = vsub.f32 %v964, %v1230
      %v1319 = vsub.f32 %v967, %v1232
      %v1320 = vsub.f32 %v970, %v1234
      %v1321 = vsub.f32 %v973, %v1236
      %v1322 = vsub.f32 %v976, %v1238
      %v1323 = vsub.f32 %v979, %v1240
      %v1324 = vsub.f32 %v982, %v1242
      %v1325 = vsub.f32 %v985, %v1244
      %v1326 = vsub.f32 %v988, %v1246
      %v1327 = vsub.f32 %v1104, %v1248
      %v1328 = vsub.f32 %v1107, %v1250
      %v1329 = vsub.f32 %v1110, %v1252
      %v1330 = vsub.f32 %v1113, %v1254
      %v1331 = vsub.f32 %v1116, %v1256
      %v1332 = vsub.f32 %v1119, %v1258
      %v1333 = vsub.f32 %v1122, %v1260
      %v1334 = vsub.f32 %v1125, %v1262
      %v1335 = vsub.f32 %v1128, %v1264
      %v1336 = vsub.f32 %v1131, %v1266
      %v1337 = vsub.f32 %v1134, %v1268
      %v1338 = vsub.f32 %v1137, %v1270
      %v1339 = vsub.f32 %v1140, %v1272
      %v1340 = vsub.f32 %v1143, %v1274
      %v1341 = vsub.f32 %v1146, %v1276
      %v1342 = vsub.f32 %v1149, %v1278
      %v1343 = vmul.f32 %v1279, 1.442695
      %v1344 = vpow.pop %v1343
      %v1345 = vmul.f32 %v1280, 1.442695
      %v1346 = vpow.pop %v1345
      %v1347 = vmul.f32 %v1281, 1.442695
      %v1348 = vpow.pop %v1347
      %v1349 = vmul.f32 %v1282, 1.442695
      %v1350 = vpow.pop %v1349
      %v1351 = vmul.f32 %v1283, 1.442695
      %v1352 = vpow.pop %v1351
      %v1353 = vmul.f32 %v1284, 1.442695
      %v1354 = vpow.pop %v1353
      %v1355 = vmul.f32 %v1285, 1.442695
      %v1356 = vpow.pop %v1355
      %v1357 = vmul.f32 %v1286, 1.442695
      %v1358 = vpow.pop %v1357
      %v1359 = vmul.f32 %v1287, 1.442695
      %v1360 = vpow.pop %v1359
      %v1361 = vmul.f32 %v1288, 1.442695
      %v1362 = vpow.pop %v1361
      %v1363 = vmul.f32 %v1289, 1.442695
      %v1364 = vpow.pop %v1363
      %v1365 = vmul.f32 %v1290, 1.442695
      %v1366 = vpow.pop %v1365
      %v1367 = vmul.f32 %v1291, 1.442695
      %v1368 = vpow.pop %v1367
      %v1369 = vmul.f32 %v1292, 1.442695
      %v1370 = vpow.pop %v1369
      %v1371 = vmul.f32 %v1293, 1.442695
      %v1372 = vpow.pop %v1371
      %v1373 = vmul.f32 %v1294, 1.442695
      %v1374 = vpow.pop %v1373
      %v1375 = vmul.f32 %v1295, 1.442695
      %v1376 = vpow.pop %v1375
      %v1377 = vmul.f32 %v1296, 1.442695
      %v1378 = vpow.pop %v1377
      %v1379 = vmul.f32 %v1297, 1.442695
      %v1380 = vpow.pop %v1379
      %v1381 = vmul.f32 %v1298, 1.442695
      %v1382 = vpow.pop %v1381
      %v1383 = vmul.f32 %v1299, 1.442695
      %v1384 = vpow.pop %v1383
      %v1385 = vmul.f32 %v1300, 1.442695
      %v1386 = vpow.pop %v1385
      %v1387 = vmul.f32 %v1301, 1.442695
      %v1388 = vpow.pop %v1387
      %v1389 = vmul.f32 %v1302, 1.442695
      %v1390 = vpow.pop %v1389
      %v1391 = vmul.f32 %v1303, 1.442695
      %v1392 = vpow.pop %v1391
      %v1393 = vmul.f32 %v1304, 1.442695
      %v1394 = vpow.pop %v1393
      %v1395 = vmul.f32 %v1305, 1.442695
      %v1396 = vpow.pop %v1395
      %v1397 = vmul.f32 %v1306, 1.442695
      %v1398 = vpow.pop %v1397
      %v1399 = vmul.f32 %v1307, 1.442695
      %v1400 = vpow.pop %v1399
      %v1401 = vmul.f32 %v1308, 1.442695
      %v1402 = vpow.pop %v1401
      %v1403 = vmul.f32 %v1309, 1.442695
      %v1404 = vpow.pop %v1403
      %v1405 = vmul.f32 %v1310, 1.442695
      %v1406 = vpow.pop %v1405
      %v1407 = vmul.f32 %v1311, 1.442695
      %v1408 = vpow.pop %v1407
      %v1409 = vmul.f32 %v1312, 1.442695
      %v1410 = vpow.pop %v1409
      %v1411 = vmul.f32 %v1313, 1.442695
      %v1412 = vpow.pop %v1411
      %v1413 = vmul.f32 %v1314, 1.442695
      %v1414 = vpow.pop %v1413
      %v1415 = vmul.f32 %v1315, 1.442695
      %v1416 = vpow.pop %v1415
      %v1417 = vmul.f32 %v1316, 1.442695
      %v1418 = vpow.pop %v1417
      %v1419 = vmul.f32 %v1317, 1.442695
      %v1420 = vpow.pop %v1419
      %v1421 = vmul.f32 %v1318, 1.442695
      %v1422 = vpow.pop %v1421
      %v1423 = vmul.f32 %v1319, 1.442695
      %v1424 = vpow.pop %v1423
      %v1425 = vmul.f32 %v1320, 1.442695
      %v1426 = vpow.pop %v1425
      %v1427 = vmul.f32 %v1321, 1.442695
      %v1428 = vpow.pop %v1427
      %v1429 = vmul.f32 %v1322, 1.442695
      %v1430 = vpow.pop %v1429
      %v1431 = vmul.f32 %v1323, 1.442695
      %v1432 = vpow.pop %v1431
      %v1433 = vmul.f32 %v1324, 1.442695
      %v1434 = vpow.pop %v1433
      %v1435 = vmul.f32 %v1325, 1.442695
      %v1436 = vpow.pop %v1435
      %v1437 = vmul.f32 %v1326, 1.442695
      %v1438 = vpow.pop %v1437
      %v1439 = vmul.f32 %v1327, 1.442695
      %v1440 = vpow.pop %v1439
      %v1441 = vmul.f32 %v1328, 1.442695
      %v1442 = vpow.pop %v1441
      %v1443 = vmul.f32 %v1329, 1.442695
      %v1444 = vpow.pop %v1443
      %v1445 = vmul.f32 %v1330, 1.442695
      %v1446 = vpow.pop %v1445
      %v1447 = vmul.f32 %v1331, 1.442695
      %v1448 = vpow.pop %v1447
      %v1449 = vmul.f32 %v1332, 1.442695
      %v1450 = vpow.pop %v1449
      %v1451 = vmul.f32 %v1333, 1.442695
      %v1452 = vpow.pop %v1451
      %v1453 = vmul.f32 %v1334, 1.442695
      %v1454 = vpow.pop %v1453
      %v1455 = vmul.f32 %v1335, 1.442695
      %v1456 = vpow.pop %v1455
      %v1457 = vmul.f32 %v1336, 1.442695
      %v1458 = vpow.pop %v1457
      %v1459 = vmul.f32 %v1337, 1.442695
      %v1460 = vpow.pop %v1459
      %v1461 = vmul.f32 %v1338, 1.442695
      %v1462 = vpow.pop %v1461
      %v1463 = vmul.f32 %v1339, 1.442695
      %v1464 = vpow.pop %v1463
      %v1465 = vmul.f32 %v1340, 1.442695
      %v1466 = vpow.pop %v1465
      %v1467 = vmul.f32 %v1341, 1.442695
      %v1468 = vpow.pop %v1467
      %v1469 = vmul.f32 %v1342, 1.442695
      %v1470 = vpow.pop %v1469
      %1471 = vadd.xlane.f32.xlu0 %v1344
      %v1472 = vpop.xlane.xlu0 %1471
      %1473 = vadd.xlane.f32.xlu0 %v1346
      %v1474 = vpop.xlane.xlu0 %1473
      %1475 = vadd.xlane.f32.xlu0 %v1348
      %v1476 = vpop.xlane.xlu0 %1475
      %1477 = vadd.xlane.f32.xlu0 %v1350
      %v1478 = vpop.xlane.xlu0 %1477
      %1479 = vadd.xlane.f32.xlu0 %v1352
      %v1480 = vpop.xlane.xlu0 %1479
      %1481 = vadd.xlane.f32.xlu0 %v1354
      %v1482 = vpop.xlane.xlu0 %1481
      %1483 = vadd.xlane.f32.xlu0 %v1356
      %v1484 = vpop.xlane.xlu0 %1483
      %1485 = vadd.xlane.f32.xlu0 %v1358
      %v1486 = vpop.xlane.xlu0 %1485
      %1487 = vadd.xlane.f32.xlu0 %v1360
      %v1488 = vpop.xlane.xlu0 %1487
      %1489 = vadd.xlane.f32.xlu0 %v1362
      %v1490 = vpop.xlane.xlu0 %1489
      %1491 = vadd.xlane.f32.xlu0 %v1364
      %v1492 = vpop.xlane.xlu0 %1491
      %1493 = vadd.xlane.f32.xlu0 %v1366
      %v1494 = vpop.xlane.xlu0 %1493
      %1495 = vadd.xlane.f32.xlu0 %v1368
      %v1496 = vpop.xlane.xlu0 %1495
      %1497 = vadd.xlane.f32.xlu0 %v1370
      %v1498 = vpop.xlane.xlu0 %1497
      %1499 = vadd.xlane.f32.xlu0 %v1372
      %v1500 = vpop.xlane.xlu0 %1499
      %1501 = vadd.xlane.f32.xlu0 %v1374
      %v1502 = vpop.xlane.xlu0 %1501
      %1503 = vadd.xlane.f32.xlu0 %v1376
      %v1504 = vpop.xlane.xlu0 %1503
      %1505 = vadd.xlane.f32.xlu0 %v1378
      %v1506 = vpop.xlane.xlu0 %1505
      %1507 = vadd.xlane.f32.xlu0 %v1380
      %v1508 = vpop.xlane.xlu0 %1507
      %1509 = vadd.xlane.f32.xlu0 %v1382
      %v1510 = vpop.xlane.xlu0 %1509
      %1511 = vadd.xlane.f32.xlu0 %v1384
      %v1512 = vpop.xlane.xlu0 %1511
      %1513 = vadd.xlane.f32.xlu0 %v1386
      %v1514 = vpop.xlane.xlu0 %1513
      %1515 = vadd.xlane.f32.xlu0 %v1388
      %v1516 = vpop.xlane.xlu0 %1515
      %1517 = vadd.xlane.f32.xlu0 %v1390
      %v1518 = vpop.xlane.xlu0 %1517
      %1519 = vadd.xlane.f32.xlu0 %v1392
      %v1520 = vpop.xlane.xlu0 %1519
      %1521 = vadd.xlane.f32.xlu0 %v1394
      %v1522 = vpop.xlane.xlu0 %1521
      %1523 = vadd.xlane.f32.xlu0 %v1396
      %v1524 = vpop.xlane.xlu0 %1523
      %1525 = vadd.xlane.f32.xlu0 %v1398
      %v1526 = vpop.xlane.xlu0 %1525
      %1527 = vadd.xlane.f32.xlu0 %v1400
      %v1528 = vpop.xlane.xlu0 %1527
      %1529 = vadd.xlane.f32.xlu0 %v1402
      %v1530 = vpop.xlane.xlu0 %1529
      %1531 = vadd.xlane.f32.xlu0 %v1404
      %v1532 = vpop.xlane.xlu0 %1531
      %1533 = vadd.xlane.f32.xlu0 %v1406
      %v1534 = vpop.xlane.xlu0 %1533
      %1535 = vadd.xlane.f32.xlu0 %v1408
      %v1536 = vpop.xlane.xlu0 %1535
      %1537 = vadd.xlane.f32.xlu0 %v1410
      %v1538 = vpop.xlane.xlu0 %1537
      %1539 = vadd.xlane.f32.xlu0 %v1412
      %v1540 = vpop.xlane.xlu0 %1539
      %1541 = vadd.xlane.f32.xlu0 %v1414
      %v1542 = vpop.xlane.xlu0 %1541
      %1543 = vadd.xlane.f32.xlu0 %v1416
      %v1544 = vpop.xlane.xlu0 %1543
      %1545 = vadd.xlane.f32.xlu0 %v1418
      %v1546 = vpop.xlane.xlu0 %1545
      %1547 = vadd.xlane.f32.xlu0 %v1420
      %v1548 = vpop.xlane.xlu0 %1547
      %1549 = vadd.xlane.f32.xlu0 %v1422
      %v1550 = vpop.xlane.xlu0 %1549
      %1551 = vadd.xlane.f32.xlu0 %v1424
      %v1552 = vpop.xlane.xlu0 %1551
      %1553 = vadd.xlane.f32.xlu0 %v1426
      %v1554 = vpop.xlane.xlu0 %1553
      %1555 = vadd.xlane.f32.xlu0 %v1428
      %v1556 = vpop.xlane.xlu0 %1555
      %1557 = vadd.xlane.f32.xlu0 %v1430
      %v1558 = vpop.xlane.xlu0 %1557
      %1559 = vadd.xlane.f32.xlu0 %v1432
      %v1560 = vpop.xlane.xlu0 %1559
      %1561 = vadd.xlane.f32.xlu0 %v1434
      %v1562 = vpop.xlane.xlu0 %1561
      %1563 = vadd.xlane.f32.xlu0 %v1436
      %v1564 = vpop.xlane.xlu0 %1563
      %1565 = vadd.xlane.f32.xlu0 %v1438
      %v1566 = vpop.xlane.xlu0 %1565
      %1567 = vadd.xlane.f32.xlu0 %v1440
      %v1568 = vpop.xlane.xlu0 %1567
      %1569 = vadd.xlane.f32.xlu0 %v1442
      %v1570 = vpop.xlane.xlu0 %1569
      %1571 = vadd.xlane.f32.xlu0 %v1444
      %v1572 = vpop.xlane.xlu0 %1571
      %1573 = vadd.xlane.f32.xlu0 %v1446
      %v1574 = vpop.xlane.xlu0 %1573
      %1575 = vadd.xlane.f32.xlu0 %v1448
      %v1576 = vpop.xlane.xlu0 %1575
      %1577 = vadd.xlane.f32.xlu0 %v1450
      %v1578 = vpop.xlane.xlu0 %1577
      %1579 = vadd.xlane.f32.xlu0 %v1452
      %v1580 = vpop.xlane.xlu0 %1579
      %1581 = vadd.xlane.f32.xlu0 %v1454
      %v1582 = vpop.xlane.xlu0 %1581
      %1583 = vadd.xlane.f32.xlu0 %v1456
      %v1584 = vpop.xlane.xlu0 %1583
      %1585 = vadd.xlane.f32.xlu0 %v1458
      %v1586 = vpop.xlane.xlu0 %1585
      %1587 = vadd.xlane.f32.xlu0 %v1460
      %v1588 = vpop.xlane.xlu0 %1587
      %1589 = vadd.xlane.f32.xlu0 %v1462
      %v1590 = vpop.xlane.xlu0 %1589
      %1591 = vadd.xlane.f32.xlu0 %v1464
      %v1592 = vpop.xlane.xlu0 %1591
      %1593 = vadd.xlane.f32.xlu0 %v1466
      %v1594 = vpop.xlane.xlu0 %1593
      %1595 = vadd.xlane.f32.xlu0 %v1468
      %v1596 = vpop.xlane.xlu0 %1595
      %1597 = vadd.xlane.f32.xlu0 %v1470
      %v1598 = vpop.xlane.xlu0 %1597
      %1599 = vmatpush.msra.mxu0 %v457
      %1600 = vmatpush.msra.mxu0 %v456
      %1601 = vmatpush.msra.mxu0 %v455
      %1602 = vmatpush.msra.mxu0 %v454
      %1603 = vmatpush.msra.mxu0 %v453
      %1604 = vmatpush.msra.mxu0 %v452
      %1605 = vmatpush.msra.mxu0 %v451
      %1606 = vmatpush.msra.mxu0 %v450
      %1607 = vmatpush.msra.mxu0 %v449
      %1608 = vmatpush.msra.mxu0 %v448
      %1609 = vmatpush.msra.mxu0 %v447
      %1610 = vmatpush.msra.mxu0 %v446
      %1611 = vmatpush.msra.mxu0 %v445
      %1612 = vmatpush.msra.mxu0 %v444
      %1613 = vmatpush.msra.mxu0 %v443
      %1614 = vmatpush.msra.mxu0 %v442
      %1615 = vmatmul.f32.gmra.mxu0 %v1344
      %v1616 = vpop.f32.mrf.mxu0
      %v1617 = vadd.f32 0.0, %v1616
      %1618 = vmatmul.f32.gmra.mxu0 %v1346
      %v1619 = vpop.f32.mrf.mxu0
      %v1620 = vadd.f32 0.0, %v1619
      %1621 = vmatmul.f32.gmra.mxu0 %v1348
      %v1622 = vpop.f32.mrf.mxu0
      %v1623 = vadd.f32 0.0, %v1622
      %1624 = vmatmul.f32.gmra.mxu0 %v1350
      %v1625 = vpop.f32.mrf.mxu0
      %v1626 = vadd.f32 0.0, %v1625
      %1627 = vmatmul.f32.gmra.mxu0 %v1352
      %v1628 = vpop.f32.mrf.mxu0
      %v1629 = vadd.f32 0.0, %v1628
      %1630 = vmatmul.f32.gmra.mxu0 %v1354
      %v1631 = vpop.f32.mrf.mxu0
      %v1632 = vadd.f32 0.0, %v1631
      %1633 = vmatmul.f32.gmra.mxu0 %v1356
      %v1634 = vpop.f32.mrf.mxu0
      %v1635 = vadd.f32 0.0, %v1634
      %1636 = vmatmul.f32.gmra.mxu0 %v1358
      %v1637 = vpop.f32.mrf.mxu0
      %v1638 = vadd.f32 0.0, %v1637
      %1639 = vmatmul.f32.gmra.mxu0 %v1360
      %v1640 = vpop.f32.mrf.mxu0
      %v1641 = vadd.f32 0.0, %v1640
      %1642 = vmatmul.f32.gmra.mxu0 %v1362
      %v1643 = vpop.f32.mrf.mxu0
      %v1644 = vadd.f32 0.0, %v1643
      %1645 = vmatmul.f32.gmra.mxu0 %v1364
      %v1646 = vpop.f32.mrf.mxu0
      %v1647 = vadd.f32 0.0, %v1646
      %1648 = vmatmul.f32.gmra.mxu0 %v1366
      %v1649 = vpop.f32.mrf.mxu0
      %v1650 = vadd.f32 0.0, %v1649
      %1651 = vmatmul.f32.gmra.mxu0 %v1368
      %v1652 = vpop.f32.mrf.mxu0
      %v1653 = vadd.f32 0.0, %v1652
      %1654 = vmatmul.f32.gmra.mxu0 %v1370
      %v1655 = vpop.f32.mrf.mxu0
      %v1656 = vadd.f32 0.0, %v1655
      %1657 = vmatmul.f32.gmra.mxu0 %v1372
      %v1658 = vpop.f32.mrf.mxu0
      %v1659 = vadd.f32 0.0, %v1658
      %1660 = vmatmul.f32.gmra.mxu0 %v1374
      %v1661 = vpop.f32.mrf.mxu0
      %v1662 = vadd.f32 0.0, %v1661
      %1663 = vdwg.mxu0
      %1664 = vmatpush.msra.mxu0 %v473
      %1665 = vmatpush.msra.mxu0 %v472
      %1666 = vmatpush.msra.mxu0 %v471
      %1667 = vmatpush.msra.mxu0 %v470
      %1668 = vmatpush.msra.mxu0 %v469
      %1669 = vmatpush.msra.mxu0 %v468
      %1670 = vmatpush.msra.mxu0 %v467
      %1671 = vmatpush.msra.mxu0 %v466
      %1672 = vmatpush.msra.mxu0 %v465
      %1673 = vmatpush.msra.mxu0 %v464
      %1674 = vmatpush.msra.mxu0 %v463
      %1675 = vmatpush.msra.mxu0 %v462
      %1676 = vmatpush.msra.mxu0 %v461
      %1677 = vmatpush.msra.mxu0 %v460
      %1678 = vmatpush.msra.mxu0 %v459
      %1679 = vmatpush.msra.mxu0 %v458
      %1680 = vmatmul.f32.gmra.mxu0 %v1376
      %v1681 = vpop.f32.mrf.mxu0
      %v1682 = vadd.f32 0.0, %v1681
      %1683 = vmatmul.f32.gmra.mxu0 %v1378
      %v1684 = vpop.f32.mrf.mxu0
      %v1685 = vadd.f32 0.0, %v1684
      %1686 = vmatmul.f32.gmra.mxu0 %v1380
      %v1687 = vpop.f32.mrf.mxu0
      %v1688 = vadd.f32 0.0, %v1687
      %1689 = vmatmul.f32.gmra.mxu0 %v1382
      %v1690 = vpop.f32.mrf.mxu0
      %v1691 = vadd.f32 0.0, %v1690
      %1692 = vmatmul.f32.gmra.mxu0 %v1384
      %v1693 = vpop.f32.mrf.mxu0
      %v1694 = vadd.f32 0.0, %v1693
      %1695 = vmatmul.f32.gmra.mxu0 %v1386
      %v1696 = vpop.f32.mrf.mxu0
      %v1697 = vadd.f32 0.0, %v1696
      %1698 = vmatmul.f32.gmra.mxu0 %v1388
      %v1699 = vpop.f32.mrf.mxu0
      %v1700 = vadd.f32 0.0, %v1699
      %1701 = vmatmul.f32.gmra.mxu0 %v1390
      %v1702 = vpop.f32.mrf.mxu0
      %v1703 = vadd.f32 0.0, %v1702
      %1704 = vmatmul.f32.gmra.mxu0 %v1392
      %v1705 = vpop.f32.mrf.mxu0
      %v1706 = vadd.f32 0.0, %v1705
      %1707 = vmatmul.f32.gmra.mxu0 %v1394
      %v1708 = vpop.f32.mrf.mxu0
      %v1709 = vadd.f32 0.0, %v1708
      %1710 = vmatmul.f32.gmra.mxu0 %v1396
      %v1711 = vpop.f32.mrf.mxu0
      %v1712 = vadd.f32 0.0, %v1711
      %1713 = vmatmul.f32.gmra.mxu0 %v1398
      %v1714 = vpop.f32.mrf.mxu0
      %v1715 = vadd.f32 0.0, %v1714
      %1716 = vmatmul.f32.gmra.mxu0 %v1400
      %v1717 = vpop.f32.mrf.mxu0
      %v1718 = vadd.f32 0.0, %v1717
      %1719 = vmatmul.f32.gmra.mxu0 %v1402
      %v1720 = vpop.f32.mrf.mxu0
      %v1721 = vadd.f32 0.0, %v1720
      %1722 = vmatmul.f32.gmra.mxu0 %v1404
      %v1723 = vpop.f32.mrf.mxu0
      %v1724 = vadd.f32 0.0, %v1723
      %1725 = vmatmul.f32.gmra.mxu0 %v1406
      %v1726 = vpop.f32.mrf.mxu0
      %v1727 = vadd.f32 0.0, %v1726
      %1728 = vdwg.mxu0
      %1729 = vmatpush.msra.mxu0 %v489
      %1730 = vmatpush.msra.mxu0 %v488
      %1731 = vmatpush.msra.mxu0 %v487
      %1732 = vmatpush.msra.mxu0 %v486
      %1733 = vmatpush.msra.mxu0 %v485
      %1734 = vmatpush.msra.mxu0 %v484
      %1735 = vmatpush.msra.mxu0 %v483
      %1736 = vmatpush.msra.mxu0 %v482
      %1737 = vmatpush.msra.mxu0 %v481
      %1738 = vmatpush.msra.mxu0 %v480
      %1739 = vmatpush.msra.mxu0 %v479
      %1740 = vmatpush.msra.mxu0 %v478
      %1741 = vmatpush.msra.mxu0 %v477
      %1742 = vmatpush.msra.mxu0 %v476
      %1743 = vmatpush.msra.mxu0 %v475
      %1744 = vmatpush.msra.mxu0 %v474
      %1745 = vmatmul.f32.gmra.mxu0 %v1408
      %v1746 = vpop.f32.mrf.mxu0
      %v1747 = vadd.f32 0.0, %v1746
      %1748 = vmatmul.f32.gmra.mxu0 %v1410
      %v1749 = vpop.f32.mrf.mxu0
      %v1750 = vadd.f32 0.0, %v1749
      %1751 = vmatmul.f32.gmra.mxu0 %v1412
      %v1752 = vpop.f32.mrf.mxu0
      %v1753 = vadd.f32 0.0, %v1752
      %1754 = vmatmul.f32.gmra.mxu0 %v1414
      %v1755 = vpop.f32.mrf.mxu0
      %v1756 = vadd.f32 0.0, %v1755
      %1757 = vmatmul.f32.gmra.mxu0 %v1416
      %v1758 = vpop.f32.mrf.mxu0
      %v1759 = vadd.f32 0.0, %v1758
      %1760 = vmatmul.f32.gmra.mxu0 %v1418
      %v1761 = vpop.f32.mrf.mxu0
      %v1762 = vadd.f32 0.0, %v1761
      %1763 = vmatmul.f32.gmra.mxu0 %v1420
      %v1764 = vpop.f32.mrf.mxu0
      %v1765 = vadd.f32 0.0, %v1764
      %1766 = vmatmul.f32.gmra.mxu0 %v1422
      %v1767 = vpop.f32.mrf.mxu0
      %v1768 = vadd.f32 0.0, %v1767
      %1769 = vmatmul.f32.gmra.mxu0 %v1424
      %v1770 = vpop.f32.mrf.mxu0
      %v1771 = vadd.f32 0.0, %v1770
      %1772 = vmatmul.f32.gmra.mxu0 %v1426
      %v1773 = vpop.f32.mrf.mxu0
      %v1774 = vadd.f32 0.0, %v1773
      %1775 = vmatmul.f32.gmra.mxu0 %v1428
      %v1776 = vpop.f32.mrf.mxu0
      %v1777 = vadd.f32 0.0, %v1776
      %1778 = vmatmul.f32.gmra.mxu0 %v1430
      %v1779 = vpop.f32.mrf.mxu0
      %v1780 = vadd.f32 0.0, %v1779
      %1781 = vmatmul.f32.gmra.mxu0 %v1432
      %v1782 = vpop.f32.mrf.mxu0
      %v1783 = vadd.f32 0.0, %v1782
      %1784 = vmatmul.f32.gmra.mxu0 %v1434
      %v1785 = vpop.f32.mrf.mxu0
      %v1786 = vadd.f32 0.0, %v1785
      %1787 = vmatmul.f32.gmra.mxu0 %v1436
      %v1788 = vpop.f32.mrf.mxu0
      %v1789 = vadd.f32 0.0, %v1788
      %1790 = vmatmul.f32.gmra.mxu0 %v1438
      %v1791 = vpop.f32.mrf.mxu0
      %v1792 = vadd.f32 0.0, %v1791
      %1793 = vdwg.mxu0
      %1794 = vmatpush.msra.mxu0 %v505
      %1795 = vmatpush.msra.mxu0 %v504
      %1796 = vmatpush.msra.mxu0 %v503
      %1797 = vmatpush.msra.mxu0 %v502
      %1798 = vmatpush.msra.mxu0 %v501
      %1799 = vmatpush.msra.mxu0 %v500
      %1800 = vmatpush.msra.mxu0 %v499
      %1801 = vmatpush.msra.mxu0 %v498
      %1802 = vmatpush.msra.mxu0 %v497
      %1803 = vmatpush.msra.mxu0 %v496
      %1804 = vmatpush.msra.mxu0 %v495
      %1805 = vmatpush.msra.mxu0 %v494
      %1806 = vmatpush.msra.mxu0 %v493
      %1807 = vmatpush.msra.mxu0 %v492
      %1808 = vmatpush.msra.mxu0 %v491
      %1809 = vmatpush.msra.mxu0 %v490
      %1810 = vmatmul.f32.gmra.mxu0 %v1440
      %v1811 = vpop.f32.mrf.mxu0
      %v1812 = vadd.f32 0.0, %v1811
      %1813 = vmatmul.f32.gmra.mxu0 %v1442
      %v1814 = vpop.f32.mrf.mxu0
      %v1815 = vadd.f32 0.0, %v1814
      %1816 = vmatmul.f32.gmra.mxu0 %v1444
      %v1817 = vpop.f32.mrf.mxu0
      %v1818 = vadd.f32 0.0, %v1817
      %1819 = vmatmul.f32.gmra.mxu0 %v1446
      %v1820 = vpop.f32.mrf.mxu0
      %v1821 = vadd.f32 0.0, %v1820
      %1822 = vmatmul.f32.gmra.mxu0 %v1448
      %v1823 = vpop.f32.mrf.mxu0
      %v1824 = vadd.f32 0.0, %v1823
      %1825 = vmatmul.f32.gmra.mxu0 %v1450
      %v1826 = vpop.f32.mrf.mxu0
      %v1827 = vadd.f32 0.0, %v1826
      %1828 = vmatmul.f32.gmra.mxu0 %v1452
      %v1829 = vpop.f32.mrf.mxu0
      %v1830 = vadd.f32 0.0, %v1829
      %1831 = vmatmul.f32.gmra.mxu0 %v1454
      %v1832 = vpop.f32.mrf.mxu0
      %v1833 = vadd.f32 0.0, %v1832
      %1834 = vmatmul.f32.gmra.mxu0 %v1456
      %v1835 = vpop.f32.mrf.mxu0
      %v1836 = vadd.f32 0.0, %v1835
      %1837 = vmatmul.f32.gmra.mxu0 %v1458
      %v1838 = vpop.f32.mrf.mxu0
      %v1839 = vadd.f32 0.0, %v1838
      %1840 = vmatmul.f32.gmra.mxu0 %v1460
      %v1841 = vpop.f32.mrf.mxu0
      %v1842 = vadd.f32 0.0, %v1841
      %1843 = vmatmul.f32.gmra.mxu0 %v1462
      %v1844 = vpop.f32.mrf.mxu0
      %v1845 = vadd.f32 0.0, %v1844
      %1846 = vmatmul.f32.gmra.mxu0 %v1464
      %v1847 = vpop.f32.mrf.mxu0
      %v1848 = vadd.f32 0.0, %v1847
      %1849 = vmatmul.f32.gmra.mxu0 %v1466
      %v1850 = vpop.f32.mrf.mxu0
      %v1851 = vadd.f32 0.0, %v1850
      %1852 = vmatmul.f32.gmra.mxu0 %v1468
      %v1853 = vpop.f32.mrf.mxu0
      %v1854 = vadd.f32 0.0, %v1853
      %1855 = vmatmul.f32.gmra.mxu0 %v1470
      %v1856 = vpop.f32.mrf.mxu0
      %v1857 = vadd.f32 0.0, %v1856
      %1858 = vdwg.mxu0
      %v1859 = vrcp.pop %v1472
      %v1860 = vrcp.pop %v1474
      %v1861 = vrcp.pop %v1476
      %v1862 = vrcp.pop %v1478
      %v1863 = vrcp.pop %v1480
      %v1864 = vrcp.pop %v1482
      %v1865 = vrcp.pop %v1484
      %v1866 = vrcp.pop %v1486
      %v1867 = vrcp.pop %v1488
      %v1868 = vrcp.pop %v1490
      %v1869 = vrcp.pop %v1492
      %v1870 = vrcp.pop %v1494
      %v1871 = vrcp.pop %v1496
      %v1872 = vrcp.pop %v1498
      %v1873 = vrcp.pop %v1500
      %v1874 = vrcp.pop %v1502
      %v1875 = vrcp.pop %v1504
      %v1876 = vrcp.pop %v1506
      %v1877 = vrcp.pop %v1508
      %v1878 = vrcp.pop %v1510
      %v1879 = vrcp.pop %v1512
      %v1880 = vrcp.pop %v1514
      %v1881 = vrcp.pop %v1516
      %v1882 = vrcp.pop %v1518
      %v1883 = vrcp.pop %v1520
      %v1884 = vrcp.pop %v1522
      %v1885 = vrcp.pop %v1524
      %v1886 = vrcp.pop %v1526
      %v1887 = vrcp.pop %v1528
      %v1888 = vrcp.pop %v1530
      %v1889 = vrcp.pop %v1532
      %v1890 = vrcp.pop %v1534
      %v1891 = vrcp.pop %v1536
      %v1892 = vrcp.pop %v1538
      %v1893 = vrcp.pop %v1540
      %v1894 = vrcp.pop %v1542
      %v1895 = vrcp.pop %v1544
      %v1896 = vrcp.pop %v1546
      %v1897 = vrcp.pop %v1548
      %v1898 = vrcp.pop %v1550
      %v1899 = vrcp.pop %v1552
      %v1900 = vrcp.pop %v1554
      %v1901 = vrcp.pop %v1556
      %v1902 = vrcp.pop %v1558
      %v1903 = vrcp.pop %v1560
      %v1904 = vrcp.pop %v1562
      %v1905 = vrcp.pop %v1564
      %v1906 = vrcp.pop %v1566
      %v1907 = vrcp.pop %v1568
      %v1908 = vrcp.pop %v1570
      %v1909 = vrcp.pop %v1572
      %v1910 = vrcp.pop %v1574
      %v1911 = vrcp.pop %v1576
      %v1912 = vrcp.pop %v1578
      %v1913 = vrcp.pop %v1580
      %v1914 = vrcp.pop %v1582
      %v1915 = vrcp.pop %v1584
      %v1916 = vrcp.pop %v1586
      %v1917 = vrcp.pop %v1588
      %v1918 = vrcp.pop %v1590
      %v1919 = vrcp.pop %v1592
      %v1920 = vrcp.pop %v1594
      %v1921 = vrcp.pop %v1596
      %v1922 = vrcp.pop %v1598
      %v1923 = vmul.f32 %v1617, %v1859
      %v1924 = vmul.f32 %v1620, %v1860
      %v1925 = vmul.f32 %v1623, %v1861
      %v1926 = vmul.f32 %v1626, %v1862
      %v1927 = vmul.f32 %v1629, %v1863
      %v1928 = vmul.f32 %v1632, %v1864
      %v1929 = vmul.f32 %v1635, %v1865
      %v1930 = vmul.f32 %v1638, %v1866
      %v1931 = vmul.f32 %v1641, %v1867
      %v1932 = vmul.f32 %v1644, %v1868
      %v1933 = vmul.f32 %v1647, %v1869
      %v1934 = vmul.f32 %v1650, %v1870
      %v1935 = vmul.f32 %v1653, %v1871
      %v1936 = vmul.f32 %v1656, %v1872
      %v1937 = vmul.f32 %v1659, %v1873
      %v1938 = vmul.f32 %v1662, %v1874
      %v1939 = vmul.f32 %v1682, %v1875
      %v1940 = vmul.f32 %v1685, %v1876
      %v1941 = vmul.f32 %v1688, %v1877
      %v1942 = vmul.f32 %v1691, %v1878
      %v1943 = vmul.f32 %v1694, %v1879
      %v1944 = vmul.f32 %v1697, %v1880
      %v1945 = vmul.f32 %v1700, %v1881
      %v1946 = vmul.f32 %v1703, %v1882
      %v1947 = vmul.f32 %v1706, %v1883
      %v1948 = vmul.f32 %v1709, %v1884
      %v1949 = vmul.f32 %v1712, %v1885
      %v1950 = vmul.f32 %v1715, %v1886
      %v1951 = vmul.f32 %v1718, %v1887
      %v1952 = vmul.f32 %v1721, %v1888
      %v1953 = vmul.f32 %v1724, %v1889
      %v1954 = vmul.f32 %v1727, %v1890
      %v1955 = vmul.f32 %v1747, %v1891
      %v1956 = vmul.f32 %v1750, %v1892
      %v1957 = vmul.f32 %v1753, %v1893
      %v1958 = vmul.f32 %v1756, %v1894
      %v1959 = vmul.f32 %v1759, %v1895
      %v1960 = vmul.f32 %v1762, %v1896
      %v1961 = vmul.f32 %v1765, %v1897
      %v1962 = vmul.f32 %v1768, %v1898
      %v1963 = vmul.f32 %v1771, %v1899
      %v1964 = vmul.f32 %v1774, %v1900
      %v1965 = vmul.f32 %v1777, %v1901
      %v1966 = vmul.f32 %v1780, %v1902
      %v1967 = vmul.f32 %v1783, %v1903
      %v1968 = vmul.f32 %v1786, %v1904
      %v1969 = vmul.f32 %v1789, %v1905
      %v1970 = vmul.f32 %v1792, %v1906
      %v1971 = vmul.f32 %v1812, %v1907
      %v1972 = vmul.f32 %v1815, %v1908
      %v1973 = vmul.f32 %v1818, %v1909
      %v1974 = vmul.f32 %v1821, %v1910
      %v1975 = vmul.f32 %v1824, %v1911
      %v1976 = vmul.f32 %v1827, %v1912
      %v1977 = vmul.f32 %v1830, %v1913
      %v1978 = vmul.f32 %v1833, %v1914
      %v1979 = vmul.f32 %v1836, %v1915
      %v1980 = vmul.f32 %v1839, %v1916
      %v1981 = vmul.f32 %v1842, %v1917
      %v1982 = vmul.f32 %v1845, %v1918
      %v1983 = vmul.f32 %v1848, %v1919
      %v1984 = vmul.f32 %v1851, %v1920
      %v1985 = vmul.f32 %v1854, %v1921
      %v1986 = vmul.f32 %v1857, %v1922
      %1987 = vst.msk [vmem:[%s248] sm:$0xff] %vm506, %v1923
      %1988 = vst.msk [vmem:[%s248 + $0x8] sm:$0xff] %vm506, %v1924
      %1989 = vst.msk [vmem:[%s248 + $0x10] sm:$0xff] %vm506, %v1925
      %1990 = vst.msk [vmem:[%s248 + $0x18] sm:$0xff] %vm506, %v1926
      %1991 = vst.msk [vmem:[%s248 + $0x20] sm:$0xff] %vm506, %v1927
      %1992 = vst.msk [vmem:[%s248 + $0x28] sm:$0xff] %vm506, %v1928
      %1993 = vst.msk [vmem:[%s248 + $0x30] sm:$0xff] %vm506, %v1929
      %1994 = vst.msk [vmem:[%s248 + $0x38] sm:$0xff] %vm506, %v1930
      %1995 = vst.msk [vmem:[%s248 + $0x40] sm:$0xff] %vm506, %v1931
      %1996 = vst.msk [vmem:[%s248 + $0x48] sm:$0xff] %vm506, %v1932
      %1997 = vst.msk [vmem:[%s248 + $0x50] sm:$0xff] %vm506, %v1933
      %1998 = vst.msk [vmem:[%s248 + $0x58] sm:$0xff] %vm506, %v1934
      %1999 = vst.msk [vmem:[%s248 + $0x60] sm:$0xff] %vm506, %v1935
      %2000 = vst.msk [vmem:[%s248 + $0x68] sm:$0xff] %vm506, %v1936
      %2001 = vst.msk [vmem:[%s248 + $0x70] sm:$0xff] %vm506, %v1937
      %2002 = vst.msk [vmem:[%s248 + $0x78] sm:$0xff] %vm506, %v1938
      %2003 = vst.msk [vmem:[%s248 + $0x80] sm:$0xff] %vm506, %v1939
      %2004 = vst.msk [vmem:[%s248 + $0x88] sm:$0xff] %vm506, %v1940
      %2005 = vst.msk [vmem:[%s248 + $0x90] sm:$0xff] %vm506, %v1941
      %2006 = vst.msk [vmem:[%s248 + $0x98] sm:$0xff] %vm506, %v1942
      %2007 = vst.msk [vmem:[%s248 + $0xa0] sm:$0xff] %vm506, %v1943
      %2008 = vst.msk [vmem:[%s248 + $0xa8] sm:$0xff] %vm506, %v1944
      %2009 = vst.msk [vmem:[%s248 + $0xb0] sm:$0xff] %vm506, %v1945
      %2010 = vst.msk [vmem:[%s248 + $0xb8] sm:$0xff] %vm506, %v1946
      %2011 = vst.msk [vmem:[%s248 + $0xc0] sm:$0xff] %vm506, %v1947
      %2012 = vst.msk [vmem:[%s248 + $0xc8] sm:$0xff] %vm506, %v1948
      %2013 = vst.msk [vmem:[%s248 + $0xd0] sm:$0xff] %vm506, %v1949
      %2014 = vst.msk [vmem:[%s248 + $0xd8] sm:$0xff] %vm506, %v1950
      %2015 = vst.msk [vmem:[%s248 + $0xe0] sm:$0xff] %vm506, %v1951
      %2016 = vst.msk [vmem:[%s248 + $0xe8] sm:$0xff] %vm506, %v1952
      %2017 = vst.msk [vmem:[%s248 + $0xf0] sm:$0xff] %vm506, %v1953
      %2018 = vst.msk [vmem:[%s248 + $0xf8] sm:$0xff] %vm506, %v1954
      %2019 = vst.msk [vmem:[%s248 + $0x100] sm:$0xff] %vm506, %v1955
      %2020 = vst.msk [vmem:[%s248 + $0x108] sm:$0xff] %vm506, %v1956
      %2021 = vst.msk [vmem:[%s248 + $0x110] sm:$0xff] %vm506, %v1957
      %2022 = vst.msk [vmem:[%s248 + $0x118] sm:$0xff] %vm506, %v1958
      %2023 = vst.msk [vmem:[%s248 + $0x120] sm:$0xff] %vm506, %v1959
      %2024 = vst.msk [vmem:[%s248 + $0x128] sm:$0xff] %vm506, %v1960
      %2025 = vst.msk [vmem:[%s248 + $0x130] sm:$0xff] %vm506, %v1961
      %2026 = vst.msk [vmem:[%s248 + $0x138] sm:$0xff] %vm506, %v1962
      %2027 = vst.msk [vmem:[%s248 + $0x140] sm:$0xff] %vm506, %v1963
      %2028 = vst.msk [vmem:[%s248 + $0x148] sm:$0xff] %vm506, %v1964
      %2029 = vst.msk [vmem:[%s248 + $0x150] sm:$0xff] %vm506, %v1965
      %2030 = vst.msk [vmem:[%s248 + $0x158] sm:$0xff] %vm506, %v1966
      %2031 = vst.msk [vmem:[%s248 + $0x160] sm:$0xff] %vm506, %v1967
      %2032 = vst.msk [vmem:[%s248 + $0x168] sm:$0xff] %vm506, %v1968
      %2033 = vst.msk [vmem:[%s248 + $0x170] sm:$0xff] %vm506, %v1969
      %2034 = vst.msk [vmem:[%s248 + $0x178] sm:$0xff] %vm506, %v1970
      %2035 = vst.msk [vmem:[%s248 + $0x180] sm:$0xff] %vm506, %v1971
      %2036 = vst.msk [vmem:[%s248 + $0x188] sm:$0xff] %vm506, %v1972
      %2037 = vst.msk [vmem:[%s248 + $0x190] sm:$0xff] %vm506, %v1973
      %2038 = vst.msk [vmem:[%s248 + $0x198] sm:$0xff] %vm506, %v1974
      %2039 = vst.msk [vmem:[%s248 + $0x1a0] sm:$0xff] %vm506, %v1975
      %2040 = vst.msk [vmem:[%s248 + $0x1a8] sm:$0xff] %vm506, %v1976
      %2041 = vst.msk [vmem:[%s248 + $0x1b0] sm:$0xff] %vm506, %v1977
      %2042 = vst.msk [vmem:[%s248 + $0x1b8] sm:$0xff] %vm506, %v1978
      %2043 = vst.msk [vmem:[%s248 + $0x1c0] sm:$0xff] %vm506, %v1979
      %2044 = vst.msk [vmem:[%s248 + $0x1c8] sm:$0xff] %vm506, %v1980
      %2045 = vst.msk [vmem:[%s248 + $0x1d0] sm:$0xff] %vm506, %v1981
      %2046 = vst.msk [vmem:[%s248 + $0x1d8] sm:$0xff] %vm506, %v1982
      %2047 = vst.msk [vmem:[%s248 + $0x1e0] sm:$0xff] %vm506, %v1983
      %2048 = vst.msk [vmem:[%s248 + $0x1e8] sm:$0xff] %vm506, %v1984
      %2049 = vst.msk [vmem:[%s248 + $0x1f0] sm:$0xff] %vm506, %v1985
      %2050 = vst.msk [vmem:[%s248 + $0x1f8] sm:$0xff] %vm506, %v1986
      %s2051 = smul.u32 16, %s19
      %p2052 = scmp.lt.s32.totalorder %s18, 1
      %s2053 = scalar_select %p2052, %s18, 1
      %p2054 = scmp.lt.s32.totalorder %s2051, 15
      %s2055 = scalar_select %p2054, %s2051, 15
      %s2056 = smul.addr %s2053, 64
      %s2057 = sadd.s32 %s2055, %s2056
      %s2058 = smul.addr %s2057, 8
      %s2059 = scalar_lea.vmem %s3, %s2058
      // Predicated region
      $region33: #{tpu_custom_call.1} parent=31 // pred_check
        %p2060 = pneg %p126
      $region34: #{tpu_custom_call.1} parent=31 // pred_check_branch
        %2062 = sbr.rel (%p2060) target = $region36
      $region35: #{tpu_custom_call.1} parent=31 // pred_region
        %s2063 = smul.u32 16, %s19
      $region36: #{tpu_custom_call.1} parent=31 // pred_fallthru
        _
    $region32: #{tpu_custom_call.1} parent=5 // pred_fallthru
      _
    %p2064 = scmp.le.s32.totalorder 2, %s9
    // Predicated region
    $region37: #{tpu_custom_call.1} parent=5 // pred_check
      %p2065 = pneg %p2064
    $region38: #{tpu_custom_call.1} parent=5 // pred_check_branch
      %2067 = sbr.rel (%p2065) target = $region40
    $region39: #{tpu_custom_call.1} parent=5 // pred_region
      %s2068 = ssub.s32 %s9, 2
      // Predicated region
      $region41: #{tpu_custom_call.1} parent=39 // pred_check
        %p2069 = pneg %p132
      $region42: #{tpu_custom_call.1} parent=39 // pred_check_branch
        %2071 = sbr.rel (%p2069) target = $region44
      $region43: #{tpu_custom_call.1} parent=39 // pred_region
        %s2072 = smul.u32 16, %s21
        %p2073 = scmp.lt.s32.totalorder %s20, 1
        %s2074 = scalar_select %p2073, %s20, 1
        %p2075 = scmp.lt.s32.totalorder %s2072, 15
        %s2076 = scalar_select %p2075, %s2072, 15
        %s2077 = smul.addr %s2074, 64
        %s2078 = sadd.s32 %s2076, %s2077
        %s2079 = smul.addr %s2078, 8
        %s2080 = scalar_lea.vmem %s3, %s2079
      $region44: #{tpu_custom_call.1} parent=39 // pred_fallthru
        _
    $region40: #{tpu_custom_call.1} parent=5 // pred_fallthru
      _
  $region6: #{tpu_custom_call.1} parent=0 // loop_footer
    %s13 = sadd.s32 1, %s9
  $region7: #{tpu_custom_call.1} parent=0 // loop_footer_branch
    %8 = sbr.rel target = $region3
  $region8: #{tpu_custom_call.1} parent=0 // loop_exit
    _

</llo_original>
